<compile_context>
chip_gen: v5e
topology: v5e:2x2
jax: 0.10.0
libtpu: 0.0.40
codegen_flags: <defaults>
</compile_context>

<pallas_src>
import functools

import jax
import jax.numpy as jnp
from jax import lax
from jax.experimental import pallas as pl
from jax.experimental.pallas import tpu as pltpu

KSIZE = 7        # fused kernel size (largest of 3/5/7)
PAD = 3          # half-width of the fused kernel


def _msblock_kernel(x_ref, w_ref, b_ref, col_ref, o_ref, xt_ref, *, H, W):
    """One batch element per grid step.

    x_ref   : (1, C, H*W)                 flattened NCHW image (lane-dense)
    w_ref   : (C, 49*C)     bf16          fused 7x7 weights, col = (kh*7+kw)*C + ci
    b_ref   : (C, 1)        f32           fused bias
    col_ref : (C, H*W)      int32         column-within-row index (for kw masks)
    o_ref   : (1, C, H*W)                 lane-dense output block
    xt_ref  : (C, H*W + 2*(3W+3)) bf16    flat, zero-haloed input tile (pitch W)
    """
    C = x_ref.shape[1]
    HW = H * W
    OFF = PAD * W + PAD                    # halo length on each side of the flat tile
    cdtype = xt_ref.dtype

    # ---- 1) halo build: zero only the two halo regions + one bulk interior copy --
    xt_ref[:, 0:OFF] = jnp.zeros((C, OFF), cdtype)
    xt_ref[:, OFF + HW:OFF + HW + OFF] = jnp.zeros((C, OFF), cdtype)
    xt_ref[:, OFF:OFF + HW] = x_ref[0, :, :].astype(cdtype)

    # ---- hoisted per-kw column masks (horizontal 'same' padding) -----------------
    # Vertical padding is physical (zero halo rows); horizontal wrap across row
    # boundaries is killed by these masks, which depend only on kw.
    col = col_ref[...]                                        # (C, HW) int32
    zero = jnp.zeros((C, HW), cdtype)
    masks = []
    for kw in range(KSIZE):
        dw = kw - PAD
        if dw == 0:
            masks.append(None)                                # center column: no mask
        else:
            masks.append(jnp.logical_and(col + dw >= 0, col + dw < W))

    # ---- 2+3) per-kh: gather 7 lane-shifted slabs -> (7C, HW) block -> one matmul -
    acc = jnp.zeros((C, HW), jnp.float32)
    for kh in range(KSIZE):
        slabs = []
        for kw in range(KSIZE):
            s = kh * W + kw                                   # static lane offset
            slab = xt_ref[:, s:s + HW]                        # (C, HW) contiguous slice
            if masks[kw] is not None:
                slab = jnp.where(masks[kw], slab, zero)
            slabs.append(slab)
        patch = jnp.concatenate(slabs, axis=0)                # (7*C, HW) bf16, registers
        w_kh = w_ref[:, kh * KSIZE * C:(kh + 1) * KSIZE * C]  # (C, 7*C) bf16
        acc = acc + jnp.dot(w_kh, patch,
                            preferred_element_type=jnp.float32)

    # ---- 4) bias + ReLU in f32, single unmasked lane-dense store -----------------
    y = jnp.maximum(acc + b_ref[...], 0.0)
    o_ref[0, :, :] = y.astype(o_ref.dtype)


@jax.jit
def multiscale_block(x, w3, b3, w5, b5, w7, b7):
    """x: (B, C, H, W) NCHW.  w{k}: (k, k, C, C) HWIO.  b{k}: (C,)."""
    B, C, H, W = x.shape
    HW = H * W
    OFF = PAD * W + PAD
    cdtype = jnp.bfloat16          # MXU-native operand dtype; accumulation stays f32

    # ---- glue (weight-sized only): fuse 3x3/5x5/7x7 into one 7x7 kernel ----------
    # Exact for stride-1 'same' convolutions.
    w5p = jnp.pad(w5, ((1, 1), (1, 1), (0, 0), (0, 0)))
    w3p = jnp.pad(w3, ((2, 2), (2, 2), (0, 0), (0, 0)))
    w_fused = (w7 + w5p + w3p).astype(jnp.float32)            # (7, 7, Cin, Cout) HWIO
    # w_mat[co, (kh*7+kw)*C + ci] = w_fused[kh, kw, ci, co]
    w_mat = w_fused.reshape(KSIZE * KSIZE * C, C).T.astype(cdtype)
    b_fused = (b3 + b5 + b7).astype(jnp.float32).reshape(C, 1)
    col_ids = jnp.broadcast_to(
        jnp.tile(jnp.arange(W, dtype=jnp.int32), H)[None, :], (C, HW))

    x_flat = x.reshape(B, C, HW)                              # metadata-only reshape

    # ---- VMEM budget: computed from actual block/scratch sizes (v7x = 64 MiB) ----
    x_bytes = C * HW * x.dtype.itemsize
    o_bytes = C * HW * x.dtype.itemsize
    w_bytes = w_mat.size * 2
    small_bytes = b_fused.size * 4 + col_ids.size * 4
    xt_bytes = C * (HW + 2 * OFF) * 2
    working = 2 * (x_bytes + o_bytes) + 2 * (w_bytes + small_bytes) + xt_bytes
    if working > 48 * 1024 * 1024:
        # TODO(synk): row-tile the image (grid over H with a halo'd band) for large H*W.
        raise NotImplementedError(
            "image too large for whole-image-per-step tiling; add row tiling")
    vmem_limit = min(2 * working + (8 << 20), 64 * 1024 * 1024)

    out_flat = pl.pallas_call(
        functools.partial(_msblock_kernel, H=H, W=W),
        out_shape=jax.ShapeDtypeStruct((B, C, HW), x.dtype),
        grid_spec=pltpu.PrefetchScalarGridSpec(
            num_scalar_prefetch=0,
            grid=(B,),
            in_specs=[
                pl.BlockSpec((1, C, HW), lambda b: (b, 0, 0)),
                pl.BlockSpec((C, KSIZE * KSIZE * C), lambda b: (0, 0)),
                pl.BlockSpec((C, 1), lambda b: (0, 0)),
                pl.BlockSpec((C, HW), lambda b: (0, 0)),
            ],
            out_specs=pl.BlockSpec((1, C, HW), lambda b: (b, 0, 0)),
            scratch_shapes=[pltpu.VMEM((C, HW + 2 * OFF), cdtype)],
        ),
        compiler_params=pltpu.CompilerParams(
            dimension_semantics=("parallel",),        # batch axis -> megacore-sharded
            vmem_limit_bytes=int(vmem_limit),
        ),
    )(x_flat, w_mat, b_fused, col_ids)

    return out_flat.reshape(B, C, H, W)


# ---------------------------- references (pure JAX) ------------------------------
def _reference_f32(x, w3, b3, w5, b5, w7, b7):
    """Full-f32 module semantics: three same-padded convs + sum + ReLU."""
    xi = jnp.transpose(x, (0, 2, 3, 1)).astype(jnp.float32)
    dn = ("NHWC", "HWIO", "NHWC")

    def conv(w, b, p):
        y = lax.conv_general_dilated(
            xi, w.astype(jnp.float32), (1, 1), ((p, p), (p, p)),
            dimension_numbers=dn, precision=lax.Precision.HIGHEST)
        return y + b[None, None, None, :]

    out = conv(w3, b3, 1) + conv(w5, b5, 2) + conv(w7, b7, 3)
    out = jnp.maximum(out, 0.0)
    return jnp.transpose(out, (0, 3, 1, 2))


def _reference_bf16_operands(x, w3, b3, w5, b5, w7, b7):
    """Reference with the kernel's exact operand quantization (bf16 x / fused w),
    f32 accumulation -- isolates bf16 rounding from any kernel logic error."""
    w_fused = (w7 + jnp.pad(w5, ((1, 1), (1, 1), (0, 0), (0, 0)))
                  + jnp.pad(w3, ((2, 2), (2, 2), (0, 0), (0, 0)))).astype(jnp.float32)
    w_q = w_fused.astype(jnp.bfloat16).astype(jnp.float32)
    x_q = x.astype(jnp.bfloat16).astype(jnp.float32)
    xi = jnp.transpose(x_q, (0, 2, 3, 1))
    dn = ("NHWC", "HWIO", "NHWC")
    y = lax.conv_general_dilated(
        xi, w_q, (1, 1), ((PAD, PAD), (PAD, PAD)),
        dimension_numbers=dn, precision=lax.Precision.HIGHEST)
    y = y + (b3 + b5 + b7)[None, None, None, :]
    y = jnp.maximum(y, 0.0)
    return jnp.transpose(y, (0, 3, 1, 2))


if __name__ == "__main__":
    B, C, H, W = 2, 4, 16, 16

    key = jax.random.PRNGKey(0)
    kx, k3w, k3b, k5w, k5b, k7w, k7b = jax.random.split(key, 7)

    def init_conv(kw_key, kb_key, k):
        fan_in = C * k * k
        bound = 1.0 / (fan_in ** 0.5)
        w = jax.random.uniform(kw_key, (k, k, C, C), jnp.float32,
                               minval=-bound, maxval=bound)
        b = jax.random.uniform(kb_key, (C,), jnp.float32,
                               minval=-bound, maxval=bound)
        return w, b

    w3, b3 = init_conv(k3w, k3b, 3)
    w5, b5 = init_conv(k5w, k5b, 5)
    w7, b7 = init_conv(k7w, k7b, 7)
    x = jax.random.normal(kx, (B, C, H, W), jnp.float32)

    out = jax.block_until_ready(multiscale_block(x, w3, b3, w5, b5, w7, b7))
    assert out.shape == (B, C, H, W) and out.dtype == x.dtype

    # Tight check: same operand quantization as the kernel -> only summation-order diffs.
    ref_q = jax.block_until_ready(_reference_bf16_operands(x, w3, b3, w5, b5, w7, b7))
    err_q = float(jnp.max(jnp.abs(out - ref_q)))
    assert err_q < 2e-3, f"kernel-logic error too large: {err_q}"

    # Loose check: full-f32 module semantics; tolerance covers bf16 operand rounding.
    ref = jax.block_until_ready(_reference_f32(x, w3, b3, w5, b5, w7, b7))
    err = float(jnp.max(jnp.abs(out - ref)))
    assert err < 5e-2, f"deviation from f32 reference too large: {err}"

    print("KERNEL_OK")
</pallas_src>

<mosaic_0001>
module attributes {stable_mosaic.version = 11 : i64} {
  func.func @_msblock_kernel(%arg0: i32, %arg1: memref<1x4x256xf32, #tpu.memory_space<vmem>>, %arg2: memref<4x196xbf16, #tpu.memory_space<vmem>>, %arg3: memref<4x1xf32, #tpu.memory_space<vmem>>, %arg4: memref<4x256xi32, #tpu.memory_space<vmem>>, %arg5: memref<1x4x256xf32, #tpu.memory_space<vmem>>, %arg6: memref<4x358xbf16, #tpu.memory_space<vmem>>) attributes {dimension_semantics = [#tpu.dimension_semantics<parallel>], iteration_bounds = array<i64: 2>, scalar_prefetch = 0 : i64, scratch_operands = 1 : i64, tpu.core_type = #tpu.core_type<tc>, window_params = [{transform_indices = @transform_0, window_bounds = array<i64: 1, 4, 256>}, {pipeline_mode = #tpu.pipeline_mode<synchronous>, transform_indices = @transform_1, window_bounds = array<i64: 4, 196>}, {pipeline_mode = #tpu.pipeline_mode<synchronous>, transform_indices = @transform_2, window_bounds = array<i64: 4, 1>}, {pipeline_mode = #tpu.pipeline_mode<synchronous>, transform_indices = @transform_3, window_bounds = array<i64: 4, 256>}, {transform_indices = @transform_4, window_bounds = array<i64: 1, 4, 256>}]} {
    %cst = arith.constant 0.000000e+00 : bf16
    %0 = vector.broadcast %cst : bf16 to vector<4x51xbf16>
    %c0 = arith.constant 0 : index
    %c0_0 = arith.constant 0 : index
    %1 = vector.load %arg6[%c0, %c0_0] : memref<4x358xbf16, #tpu.memory_space<vmem>>, vector<4x51xbf16>
    tpu.vector_store %arg6[%c0, %c0_0], %0 {strides = array<i32>} : memref<4x358xbf16, #tpu.memory_space<vmem>>, vector<4x51xbf16>,
    %cst_1 = arith.constant 0.000000e+00 : bf16
    %2 = vector.broadcast %cst_1 : bf16 to vector<4x51xbf16>
    %c0_2 = arith.constant 0 : index
    %c307 = arith.constant 307 : index
    %3 = vector.load %arg6[%c0_2, %c307] : memref<4x358xbf16, #tpu.memory_space<vmem>>, vector<4x51xbf16>
    tpu.vector_store %arg6[%c0_2, %c307], %2 {strides = array<i32>} : memref<4x358xbf16, #tpu.memory_space<vmem>>, vector<4x51xbf16>,
    %c0_3 = arith.constant 0 : index
    %c0_4 = arith.constant 0 : index
    %c0_5 = arith.constant 0 : index
    %4 = vector.load %arg1[%c0_3, %c0_4, %c0_5] : memref<1x4x256xf32, #tpu.memory_space<vmem>>, vector<1x4x256xf32>
    %5 = vector.shape_cast %4 : vector<1x4x256xf32> to vector<4x256xf32>
    %6 = arith.truncf %5 : vector<4x256xf32> to vector<4x256xbf16>
    %c0_6 = arith.constant 0 : index
    %c51 = arith.constant 51 : index
    %7 = vector.load %arg6[%c0_6, %c51] : memref<4x358xbf16, #tpu.memory_space<vmem>>, vector<4x256xbf16>
    tpu.vector_store %arg6[%c0_6, %c51], %6 {strides = array<i32>} : memref<4x358xbf16, #tpu.memory_space<vmem>>, vector<4x256xbf16>,
    %c0_7 = arith.constant 0 : index
    %c0_8 = arith.constant 0 : index
    %8 = vector.load %arg4[%c0_7, %c0_8] : memref<4x256xi32, #tpu.memory_space<vmem>>, vector<4x256xi32>
    %cst_9 = arith.constant 0.000000e+00 : bf16
    %9 = vector.broadcast %cst_9 : bf16 to vector<4x256xbf16>
    %c-3_i32 = arith.constant -3 : i32
    %10 = vector.broadcast %c-3_i32 : i32 to vector<4x256xi32>
    %11 = arith.addi %8, %10 : vector<4x256xi32>
    %c0_i32 = arith.constant 0 : i32
    %12 = vector.broadcast %c0_i32 : i32 to vector<4x256xi32>
    %13 = arith.cmpi sge, %11, %12 : vector<4x256xi32>
    %c-3_i32_10 = arith.constant -3 : i32
    %14 = vector.broadcast %c-3_i32_10 : i32 to vector<4x256xi32>
    %15 = arith.addi %8, %14 : vector<4x256xi32>
    %c16_i32 = arith.constant 16 : i32
    %16 = vector.broadcast %c16_i32 : i32 to vector<4x256xi32>
    %17 = arith.cmpi slt, %15, %16 : vector<4x256xi32>
    %18 = arith.andi %13, %17 : vector<4x256xi1>
    %c-2_i32 = arith.constant -2 : i32
    %19 = vector.broadcast %c-2_i32 : i32 to vector<4x256xi32>
    %20 = arith.addi %8, %19 : vector<4x256xi32>
    %c0_i32_11 = arith.constant 0 : i32
    %21 = vector.broadcast %c0_i32_11 : i32 to vector<4x256xi32>
    %22 = arith.cmpi sge, %20, %21 : vector<4x256xi32>
    %c-2_i32_12 = arith.constant -2 : i32
    %23 = vector.broadcast %c-2_i32_12 : i32 to vector<4x256xi32>
    %24 = arith.addi %8, %23 : vector<4x256xi32>
    %c16_i32_13 = arith.constant 16 : i32
    %25 = vector.broadcast %c16_i32_13 : i32 to vector<4x256xi32>
    %26 = arith.cmpi slt, %24, %25 : vector<4x256xi32>
    %27 = arith.andi %22, %26 : vector<4x256xi1>
    %c-1_i32 = arith.constant -1 : i32
    %28 = vector.broadcast %c-1_i32 : i32 to vector<4x256xi32>
    %29 = arith.addi %8, %28 : vector<4x256xi32>
    %c0_i32_14 = arith.constant 0 : i32
    %30 = vector.broadcast %c0_i32_14 : i32 to vector<4x256xi32>
    %31 = arith.cmpi sge, %29, %30 : vector<4x256xi32>
    %c-1_i32_15 = arith.constant -1 : i32
    %32 = vector.broadcast %c-1_i32_15 : i32 to vector<4x256xi32>
    %33 = arith.addi %8, %32 : vector<4x256xi32>
    %c16_i32_16 = arith.constant 16 : i32
    %34 = vector.broadcast %c16_i32_16 : i32 to vector<4x256xi32>
    %35 = arith.cmpi slt, %33, %34 : vector<4x256xi32>
    %36 = arith.andi %31, %35 : vector<4x256xi1>
    %c1_i32 = arith.constant 1 : i32
    %37 = vector.broadcast %c1_i32 : i32 to vector<4x256xi32>
    %38 = arith.addi %8, %37 : vector<4x256xi32>
    %c0_i32_17 = arith.constant 0 : i32
    %39 = vector.broadcast %c0_i32_17 : i32 to vector<4x256xi32>
    %40 = arith.cmpi sge, %38, %39 : vector<4x256xi32>
    %c1_i32_18 = arith.constant 1 : i32
    %41 = vector.broadcast %c1_i32_18 : i32 to vector<4x256xi32>
    %42 = arith.addi %8, %41 : vector<4x256xi32>
    %c16_i32_19 = arith.constant 16 : i32
    %43 = vector.broadcast %c16_i32_19 : i32 to vector<4x256xi32>
    %44 = arith.cmpi slt, %42, %43 : vector<4x256xi32>
    %45 = arith.andi %40, %44 : vector<4x256xi1>
    %c2_i32 = arith.constant 2 : i32
    %46 = vector.broadcast %c2_i32 : i32 to vector<4x256xi32>
    %47 = arith.addi %8, %46 : vector<4x256xi32>
    %c0_i32_20 = arith.constant 0 : i32
    %48 = vector.broadcast %c0_i32_20 : i32 to vector<4x256xi32>
    %49 = arith.cmpi sge, %47, %48 : vector<4x256xi32>
    %c2_i32_21 = arith.constant 2 : i32
    %50 = vector.broadcast %c2_i32_21 : i32 to vector<4x256xi32>
    %51 = arith.addi %8, %50 : vector<4x256xi32>
    %c16_i32_22 = arith.constant 16 : i32
    %52 = vector.broadcast %c16_i32_22 : i32 to vector<4x256xi32>
    %53 = arith.cmpi slt, %51, %52 : vector<4x256xi32>
    %54 = arith.andi %49, %53 : vector<4x256xi1>
    %c3_i32 = arith.constant 3 : i32
    %55 = vector.broadcast %c3_i32 : i32 to vector<4x256xi32>
    %56 = arith.addi %8, %55 : vector<4x256xi32>
    %c0_i32_23 = arith.constant 0 : i32
    %57 = vector.broadcast %c0_i32_23 : i32 to vector<4x256xi32>
    %58 = arith.cmpi sge, %56, %57 : vector<4x256xi32>
    %c3_i32_24 = arith.constant 3 : i32
    %59 = vector.broadcast %c3_i32_24 : i32 to vector<4x256xi32>
    %60 = arith.addi %8, %59 : vector<4x256xi32>
    %c16_i32_25 = arith.constant 16 : i32
    %61 = vector.broadcast %c16_i32_25 : i32 to vector<4x256xi32>
    %62 = arith.cmpi slt, %60, %61 : vector<4x256xi32>
    %63 = arith.andi %58, %62 : vector<4x256xi1>
    %cst_26 = arith.constant 0.000000e+00 : f32
    %64 = vector.broadcast %cst_26 : f32 to vector<4x256xf32>
    %c0_27 = arith.constant 0 : index
    %c0_28 = arith.constant 0 : index
    %65 = vector.load %arg6[%c0_27, %c0_28] : memref<4x358xbf16, #tpu.memory_space<vmem>>, vector<4x256xbf16>
    %66 = arith.select %18, %65, %9 : vector<4x256xi1>, vector<4x256xbf16>
    %c0_29 = arith.constant 0 : index
    %c1 = arith.constant 1 : index
    %67 = vector.load %arg6[%c0_29, %c1] : memref<4x358xbf16, #tpu.memory_space<vmem>>, vector<4x256xbf16>
    %68 = arith.select %27, %67, %9 : vector<4x256xi1>, vector<4x256xbf16>
    %c0_30 = arith.constant 0 : index
    %c2 = arith.constant 2 : index
    %69 = vector.load %arg6[%c0_30, %c2] : memref<4x358xbf16, #tpu.memory_space<vmem>>, vector<4x256xbf16>
    %70 = arith.select %36, %69, %9 : vector<4x256xi1>, vector<4x256xbf16>
    %c0_31 = arith.constant 0 : index
    %c3 = arith.constant 3 : index
    %71 = vector.load %arg6[%c0_31, %c3] : memref<4x358xbf16, #tpu.memory_space<vmem>>, vector<4x256xbf16>
    %c0_32 = arith.constant 0 : index
    %c4 = arith.constant 4 : index
    %72 = vector.load %arg6[%c0_32, %c4] : memref<4x358xbf16, #tpu.memory_space<vmem>>, vector<4x256xbf16>
    %73 = arith.select %45, %72, %9 : vector<4x256xi1>, vector<4x256xbf16>
    %c0_33 = arith.constant 0 : index
    %c5 = arith.constant 5 : index
    %74 = vector.load %arg6[%c0_33, %c5] : memref<4x358xbf16, #tpu.memory_space<vmem>>, vector<4x256xbf16>
    %75 = arith.select %54, %74, %9 : vector<4x256xi1>, vector<4x256xbf16>
    %c0_34 = arith.constant 0 : index
    %c6 = arith.constant 6 : index
    %76 = vector.load %arg6[%c0_34, %c6] : memref<4x358xbf16, #tpu.memory_space<vmem>>, vector<4x256xbf16>
    %77 = arith.select %63, %76, %9 : vector<4x256xi1>, vector<4x256xbf16>
    %78 = tpu.concatenate %66, %68, %70, %71, %73, %75, %77 in 0 : vector<4x256xbf16>, vector<4x256xbf16>, vector<4x256xbf16>, vector<4x256xbf16>, vector<4x256xbf16>, vector<4x256xbf16>, vector<4x256xbf16> -> vector<28x256xbf16>
    %c0_35 = arith.constant 0 : index
    %c0_36 = arith.constant 0 : index
    %79 = vector.load %arg2[%c0_35, %c0_36] : memref<4x196xbf16, #tpu.memory_space<vmem>>, vector<4x28xbf16>
    %cst_37 = arith.constant dense<0.000000e+00> : vector<4x256xf32>
    %80 = tpu.matmul %79, %78, %cst_37 {dimension_numbers = #tpu.dot_dimension_numbers<[1], [0], [0], [1], [0, 0, 1, 1], [], []>} : vector<4x28xbf16>, vector<28x256xbf16>, vector<4x256xf32> -> vector<4x256xf32>
    %81 = arith.addf %64, %80 : vector<4x256xf32>
    %c0_38 = arith.constant 0 : index
    %c16 = arith.constant 16 : index
    %82 = vector.load %arg6[%c0_38, %c16] : memref<4x358xbf16, #tpu.memory_space<vmem>>, vector<4x256xbf16>
    %83 = arith.select %18, %82, %9 : vector<4x256xi1>, vector<4x256xbf16>
    %c0_39 = arith.constant 0 : index
    %c17 = arith.constant 17 : index
    %84 = vector.load %arg6[%c0_39, %c17] : memref<4x358xbf16, #tpu.memory_space<vmem>>, vector<4x256xbf16>
    %85 = arith.select %27, %84, %9 : vector<4x256xi1>, vector<4x256xbf16>
    %c0_40 = arith.constant 0 : index
    %c18 = arith.constant 18 : index
    %86 = vector.load %arg6[%c0_40, %c18] : memref<4x358xbf16, #tpu.memory_space<vmem>>, vector<4x256xbf16>
    %87 = arith.select %36, %86, %9 : vector<4x256xi1>, vector<4x256xbf16>
    %c0_41 = arith.constant 0 : index
    %c19 = arith.constant 19 : index
    %88 = vector.load %arg6[%c0_41, %c19] : memref<4x358xbf16, #tpu.memory_space<vmem>>, vector<4x256xbf16>
    %c0_42 = arith.constant 0 : index
    %c20 = arith.constant 20 : index
    %89 = vector.load %arg6[%c0_42, %c20] : memref<4x358xbf16, #tpu.memory_space<vmem>>, vector<4x256xbf16>
    %90 = arith.select %45, %89, %9 : vector<4x256xi1>, vector<4x256xbf16>
    %c0_43 = arith.constant 0 : index
    %c21 = arith.constant 21 : index
    %91 = vector.load %arg6[%c0_43, %c21] : memref<4x358xbf16, #tpu.memory_space<vmem>>, vector<4x256xbf16>
    %92 = arith.select %54, %91, %9 : vector<4x256xi1>, vector<4x256xbf16>
    %c0_44 = arith.constant 0 : index
    %c22 = arith.constant 22 : index
    %93 = vector.load %arg6[%c0_44, %c22] : memref<4x358xbf16, #tpu.memory_space<vmem>>, vector<4x256xbf16>
    %94 = arith.select %63, %93, %9 : vector<4x256xi1>, vector<4x256xbf16>
    %95 = tpu.concatenate %83, %85, %87, %88, %90, %92, %94 in 0 : vector<4x256xbf16>, vector<4x256xbf16>, vector<4x256xbf16>, vector<4x256xbf16>, vector<4x256xbf16>, vector<4x256xbf16>, vector<4x256xbf16> -> vector<28x256xbf16>
    %c0_45 = arith.constant 0 : index
    %c28 = arith.constant 28 : index
    %96 = vector.load %arg2[%c0_45, %c28] : memref<4x196xbf16, #tpu.memory_space<vmem>>, vector<4x28xbf16>
    %cst_46 = arith.constant dense<0.000000e+00> : vector<4x256xf32>
    %97 = tpu.matmul %96, %95, %cst_46 {dimension_numbers = #tpu.dot_dimension_numbers<[1], [0], [0], [1], [0, 0, 1, 1], [], []>} : vector<4x28xbf16>, vector<28x256xbf16>, vector<4x256xf32> -> vector<4x256xf32>
    %98 = arith.addf %81, %97 : vector<4x256xf32>
    %c0_47 = arith.constant 0 : index
    %c32 = arith.constant 32 : index
    %99 = vector.load %arg6[%c0_47, %c32] : memref<4x358xbf16, #tpu.memory_space<vmem>>, vector<4x256xbf16>
    %100 = arith.select %18, %99, %9 : vector<4x256xi1>, vector<4x256xbf16>
    %c0_48 = arith.constant 0 : index
    %c33 = arith.constant 33 : index
    %101 = vector.load %arg6[%c0_48, %c33] : memref<4x358xbf16, #tpu.memory_space<vmem>>, vector<4x256xbf16>
    %102 = arith.select %27, %101, %9 : vector<4x256xi1>, vector<4x256xbf16>
    %c0_49 = arith.constant 0 : index
    %c34 = arith.constant 34 : index
    %103 = vector.load %arg6[%c0_49, %c34] : memref<4x358xbf16, #tpu.memory_space<vmem>>, vector<4x256xbf16>
    %104 = arith.select %36, %103, %9 : vector<4x256xi1>, vector<4x256xbf16>
    %c0_50 = arith.constant 0 : index
    %c35 = arith.constant 35 : index
    %105 = vector.load %arg6[%c0_50, %c35] : memref<4x358xbf16, #tpu.memory_space<vmem>>, vector<4x256xbf16>
    %c0_51 = arith.constant 0 : index
    %c36 = arith.constant 36 : index
    %106 = vector.load %arg6[%c0_51, %c36] : memref<4x358xbf16, #tpu.memory_space<vmem>>, vector<4x256xbf16>
    %107 = arith.select %45, %106, %9 : vector<4x256xi1>, vector<4x256xbf16>
    %c0_52 = arith.constant 0 : index
    %c37 = arith.constant 37 : index
    %108 = vector.load %arg6[%c0_52, %c37] : memref<4x358xbf16, #tpu.memory_space<vmem>>, vector<4x256xbf16>
    %109 = arith.select %54, %108, %9 : vector<4x256xi1>, vector<4x256xbf16>
    %c0_53 = arith.constant 0 : index
    %c38 = arith.constant 38 : index
    %110 = vector.load %arg6[%c0_53, %c38] : memref<4x358xbf16, #tpu.memory_space<vmem>>, vector<4x256xbf16>
    %111 = arith.select %63, %110, %9 : vector<4x256xi1>, vector<4x256xbf16>
    %112 = tpu.concatenate %100, %102, %104, %105, %107, %109, %111 in 0 : vector<4x256xbf16>, vector<4x256xbf16>, vector<4x256xbf16>, vector<4x256xbf16>, vector<4x256xbf16>, vector<4x256xbf16>, vector<4x256xbf16> -> vector<28x256xbf16>
    %c0_54 = arith.constant 0 : index
    %c56 = arith.constant 56 : index
    %113 = vector.load %arg2[%c0_54, %c56] : memref<4x196xbf16, #tpu.memory_space<vmem>>, vector<4x28xbf16>
    %cst_55 = arith.constant dense<0.000000e+00> : vector<4x256xf32>
    %114 = tpu.matmul %113, %112, %cst_55 {dimension_numbers = #tpu.dot_dimension_numbers<[1], [0], [0], [1], [0, 0, 1, 1], [], []>} : vector<4x28xbf16>, vector<28x256xbf16>, vector<4x256xf32> -> vector<4x256xf32>
    %115 = arith.addf %98, %114 : vector<4x256xf32>
    %c0_56 = arith.constant 0 : index
    %c48 = arith.constant 48 : index
    %116 = vector.load %arg6[%c0_56, %c48] : memref<4x358xbf16, #tpu.memory_space<vmem>>, vector<4x256xbf16>
    %117 = arith.select %18, %116, %9 : vector<4x256xi1>, vector<4x256xbf16>
    %c0_57 = arith.constant 0 : index
    %c49 = arith.constant 49 : index
    %118 = vector.load %arg6[%c0_57, %c49] : memref<4x358xbf16, #tpu.memory_space<vmem>>, vector<4x256xbf16>
    %119 = arith.select %27, %118, %9 : vector<4x256xi1>, vector<4x256xbf16>
    %c0_58 = arith.constant 0 : index
    %c50 = arith.constant 50 : index
    %120 = vector.load %arg6[%c0_58, %c50] : memref<4x358xbf16, #tpu.memory_space<vmem>>, vector<4x256xbf16>
    %121 = arith.select %36, %120, %9 : vector<4x256xi1>, vector<4x256xbf16>
    %c0_59 = arith.constant 0 : index
    %c51_60 = arith.constant 51 : index
    %122 = vector.load %arg6[%c0_59, %c51_60] : memref<4x358xbf16, #tpu.memory_space<vmem>>, vector<4x256xbf16>
    %c0_61 = arith.constant 0 : index
    %c52 = arith.constant 52 : index
    %123 = vector.load %arg6[%c0_61, %c52] : memref<4x358xbf16, #tpu.memory_space<vmem>>, vector<4x256xbf16>
    %124 = arith.select %45, %123, %9 : vector<4x256xi1>, vector<4x256xbf16>
    %c0_62 = arith.constant 0 : index
    %c53 = arith.constant 53 : index
    %125 = vector.load %arg6[%c0_62, %c53] : memref<4x358xbf16, #tpu.memory_space<vmem>>, vector<4x256xbf16>
    %126 = arith.select %54, %125, %9 : vector<4x256xi1>, vector<4x256xbf16>
    %c0_63 = arith.constant 0 : index
    %c54 = arith.constant 54 : index
    %127 = vector.load %arg6[%c0_63, %c54] : memref<4x358xbf16, #tpu.memory_space<vmem>>, vector<4x256xbf16>
    %128 = arith.select %63, %127, %9 : vector<4x256xi1>, vector<4x256xbf16>
    %129 = tpu.concatenate %117, %119, %121, %122, %124, %126, %128 in 0 : vector<4x256xbf16>, vector<4x256xbf16>, vector<4x256xbf16>, vector<4x256xbf16>, vector<4x256xbf16>, vector<4x256xbf16>, vector<4x256xbf16> -> vector<28x256xbf16>
    %c0_64 = arith.constant 0 : index
    %c84 = arith.constant 84 : index
    %130 = vector.load %arg2[%c0_64, %c84] : memref<4x196xbf16, #tpu.memory_space<vmem>>, vector<4x28xbf16>
    %cst_65 = arith.constant dense<0.000000e+00> : vector<4x256xf32>
    %131 = tpu.matmul %130, %129, %cst_65 {dimension_numbers = #tpu.dot_dimension_numbers<[1], [0], [0], [1], [0, 0, 1, 1], [], []>} : vector<4x28xbf16>, vector<28x256xbf16>, vector<4x256xf32> -> vector<4x256xf32>
    %132 = arith.addf %115, %131 : vector<4x256xf32>
    %c0_66 = arith.constant 0 : index
    %c64 = arith.constant 64 : index
    %133 = vector.load %arg6[%c0_66, %c64] : memref<4x358xbf16, #tpu.memory_space<vmem>>, vector<4x256xbf16>
    %134 = arith.select %18, %133, %9 : vector<4x256xi1>, vector<4x256xbf16>
    %c0_67 = arith.constant 0 : index
    %c65 = arith.constant 65 : index
    %135 = vector.load %arg6[%c0_67, %c65] : memref<4x358xbf16, #tpu.memory_space<vmem>>, vector<4x256xbf16>
    %136 = arith.select %27, %135, %9 : vector<4x256xi1>, vector<4x256xbf16>
    %c0_68 = arith.constant 0 : index
    %c66 = arith.constant 66 : index
    %137 = vector.load %arg6[%c0_68, %c66] : memref<4x358xbf16, #tpu.memory_space<vmem>>, vector<4x256xbf16>
    %138 = arith.select %36, %137, %9 : vector<4x256xi1>, vector<4x256xbf16>
    %c0_69 = arith.constant 0 : index
    %c67 = arith.constant 67 : index
    %139 = vector.load %arg6[%c0_69, %c67] : memref<4x358xbf16, #tpu.memory_space<vmem>>, vector<4x256xbf16>
    %c0_70 = arith.constant 0 : index
    %c68 = arith.constant 68 : index
    %140 = vector.load %arg6[%c0_70, %c68] : memref<4x358xbf16, #tpu.memory_space<vmem>>, vector<4x256xbf16>
    %141 = arith.select %45, %140, %9 : vector<4x256xi1>, vector<4x256xbf16>
    %c0_71 = arith.constant 0 : index
    %c69 = arith.constant 69 : index
    %142 = vector.load %arg6[%c0_71, %c69] : memref<4x358xbf16, #tpu.memory_space<vmem>>, vector<4x256xbf16>
    %143 = arith.select %54, %142, %9 : vector<4x256xi1>, vector<4x256xbf16>
    %c0_72 = arith.constant 0 : index
    %c70 = arith.constant 70 : index
    %144 = vector.load %arg6[%c0_72, %c70] : memref<4x358xbf16, #tpu.memory_space<vmem>>, vector<4x256xbf16>
    %145 = arith.select %63, %144, %9 : vector<4x256xi1>, vector<4x256xbf16>
    %146 = tpu.concatenate %134, %136, %138, %139, %141, %143, %145 in 0 : vector<4x256xbf16>, vector<4x256xbf16>, vector<4x256xbf16>, vector<4x256xbf16>, vector<4x256xbf16>, vector<4x256xbf16>, vector<4x256xbf16> -> vector<28x256xbf16>
    %c0_73 = arith.constant 0 : index
    %c112 = arith.constant 112 : index
    %147 = vector.load %arg2[%c0_73, %c112] : memref<4x196xbf16, #tpu.memory_space<vmem>>, vector<4x28xbf16>
    %cst_74 = arith.constant dense<0.000000e+00> : vector<4x256xf32>
    %148 = tpu.matmul %147, %146, %cst_74 {dimension_numbers = #tpu.dot_dimension_numbers<[1], [0], [0], [1], [0, 0, 1, 1], [], []>} : vector<4x28xbf16>, vector<28x256xbf16>, vector<4x256xf32> -> vector<4x256xf32>
    %149 = arith.addf %132, %148 : vector<4x256xf32>
    %c0_75 = arith.constant 0 : index
    %c80 = arith.constant 80 : index
    %150 = vector.load %arg6[%c0_75, %c80] : memref<4x358xbf16, #tpu.memory_space<vmem>>, vector<4x256xbf16>
    %151 = arith.select %18, %150, %9 : vector<4x256xi1>, vector<4x256xbf16>
    %c0_76 = arith.constant 0 : index
    %c81 = arith.constant 81 : index
    %152 = vector.load %arg6[%c0_76, %c81] : memref<4x358xbf16, #tpu.memory_space<vmem>>, vector<4x256xbf16>
    %153 = arith.select %27, %152, %9 : vector<4x256xi1>, vector<4x256xbf16>
    %c0_77 = arith.constant 0 : index
    %c82 = arith.constant 82 : index
    %154 = vector.load %arg6[%c0_77, %c82] : memref<4x358xbf16, #tpu.memory_space<vmem>>, vector<4x256xbf16>
    %155 = arith.select %36, %154, %9 : vector<4x256xi1>, vector<4x256xbf16>
    %c0_78 = arith.constant 0 : index
    %c83 = arith.constant 83 : index
    %156 = vector.load %arg6[%c0_78, %c83] : memref<4x358xbf16, #tpu.memory_space<vmem>>, vector<4x256xbf16>
    %c0_79 = arith.constant 0 : index
    %c84_80 = arith.constant 84 : index
    %157 = vector.load %arg6[%c0_79, %c84_80] : memref<4x358xbf16, #tpu.memory_space<vmem>>, vector<4x256xbf16>
    %158 = arith.select %45, %157, %9 : vector<4x256xi1>, vector<4x256xbf16>
    %c0_81 = arith.constant 0 : index
    %c85 = arith.constant 85 : index
    %159 = vector.load %arg6[%c0_81, %c85] : memref<4x358xbf16, #tpu.memory_space<vmem>>, vector<4x256xbf16>
    %160 = arith.select %54, %159, %9 : vector<4x256xi1>, vector<4x256xbf16>
    %c0_82 = arith.constant 0 : index
    %c86 = arith.constant 86 : index
    %161 = vector.load %arg6[%c0_82, %c86] : memref<4x358xbf16, #tpu.memory_space<vmem>>, vector<4x256xbf16>
    %162 = arith.select %63, %161, %9 : vector<4x256xi1>, vector<4x256xbf16>
    %163 = tpu.concatenate %151, %153, %155, %156, %158, %160, %162 in 0 : vector<4x256xbf16>, vector<4x256xbf16>, vector<4x256xbf16>, vector<4x256xbf16>, vector<4x256xbf16>, vector<4x256xbf16>, vector<4x256xbf16> -> vector<28x256xbf16>
    %c0_83 = arith.constant 0 : index
    %c140 = arith.constant 140 : index
    %164 = vector.load %arg2[%c0_83, %c140] : memref<4x196xbf16, #tpu.memory_space<vmem>>, vector<4x28xbf16>
    %cst_84 = arith.constant dense<0.000000e+00> : vector<4x256xf32>
    %165 = tpu.matmul %164, %163, %cst_84 {dimension_numbers = #tpu.dot_dimension_numbers<[1], [0], [0], [1], [0, 0, 1, 1], [], []>} : vector<4x28xbf16>, vector<28x256xbf16>, vector<4x256xf32> -> vector<4x256xf32>
    %166 = arith.addf %149, %165 : vector<4x256xf32>
    %c0_85 = arith.constant 0 : index
    %c96 = arith.constant 96 : index
    %167 = vector.load %arg6[%c0_85, %c96] : memref<4x358xbf16, #tpu.memory_space<vmem>>, vector<4x256xbf16>
    %168 = arith.select %18, %167, %9 : vector<4x256xi1>, vector<4x256xbf16>
    %c0_86 = arith.constant 0 : index
    %c97 = arith.constant 97 : index
    %169 = vector.load %arg6[%c0_86, %c97] : memref<4x358xbf16, #tpu.memory_space<vmem>>, vector<4x256xbf16>
    %170 = arith.select %27, %169, %9 : vector<4x256xi1>, vector<4x256xbf16>
    %c0_87 = arith.constant 0 : index
    %c98 = arith.constant 98 : index
    %171 = vector.load %arg6[%c0_87, %c98] : memref<4x358xbf16, #tpu.memory_space<vmem>>, vector<4x256xbf16>
    %172 = arith.select %36, %171, %9 : vector<4x256xi1>, vector<4x256xbf16>
    %c0_88 = arith.constant 0 : index
    %c99 = arith.constant 99 : index
    %173 = vector.load %arg6[%c0_88, %c99] : memref<4x358xbf16, #tpu.memory_space<vmem>>, vector<4x256xbf16>
    %c0_89 = arith.constant 0 : index
    %c100 = arith.constant 100 : index
    %174 = vector.load %arg6[%c0_89, %c100] : memref<4x358xbf16, #tpu.memory_space<vmem>>, vector<4x256xbf16>
    %175 = arith.select %45, %174, %9 : vector<4x256xi1>, vector<4x256xbf16>
    %c0_90 = arith.constant 0 : index
    %c101 = arith.constant 101 : index
    %176 = vector.load %arg6[%c0_90, %c101] : memref<4x358xbf16, #tpu.memory_space<vmem>>, vector<4x256xbf16>
    %177 = arith.select %54, %176, %9 : vector<4x256xi1>, vector<4x256xbf16>
    %c0_91 = arith.constant 0 : index
    %c102 = arith.constant 102 : index
    %178 = vector.load %arg6[%c0_91, %c102] : memref<4x358xbf16, #tpu.memory_space<vmem>>, vector<4x256xbf16>
    %179 = arith.select %63, %178, %9 : vector<4x256xi1>, vector<4x256xbf16>
    %180 = tpu.concatenate %168, %170, %172, %173, %175, %177, %179 in 0 : vector<4x256xbf16>, vector<4x256xbf16>, vector<4x256xbf16>, vector<4x256xbf16>, vector<4x256xbf16>, vector<4x256xbf16>, vector<4x256xbf16> -> vector<28x256xbf16>
    %c0_92 = arith.constant 0 : index
    %c168 = arith.constant 168 : index
    %181 = vector.load %arg2[%c0_92, %c168] : memref<4x196xbf16, #tpu.memory_space<vmem>>, vector<4x28xbf16>
    %cst_93 = arith.constant dense<0.000000e+00> : vector<4x256xf32>
    %182 = tpu.matmul %181, %180, %cst_93 {dimension_numbers = #tpu.dot_dimension_numbers<[1], [0], [0], [1], [0, 0, 1, 1], [], []>} : vector<4x28xbf16>, vector<28x256xbf16>, vector<4x256xf32> -> vector<4x256xf32>
    %183 = arith.addf %166, %182 : vector<4x256xf32>
    %c0_94 = arith.constant 0 : index
    %c0_95 = arith.constant 0 : index
    %184 = vector.load %arg3[%c0_94, %c0_95] : memref<4x1xf32, #tpu.memory_space<vmem>>, vector<4x1xf32>
    %185 = vector.broadcast %184 : vector<4x1xf32> to vector<4x256xf32>
    %186 = arith.addf %183, %185 : vector<4x256xf32>
    %cst_96 = arith.constant 0.000000e+00 : f32
    %187 = vector.broadcast %cst_96 : f32 to vector<4x256xf32>
    %188 = arith.maximumf %186, %187 : vector<4x256xf32>
    %c0_97 = arith.constant 0 : index
    %c0_98 = arith.constant 0 : index
    %c0_99 = arith.constant 0 : index
    %189 = vector.load %arg5[%c0_97, %c0_98, %c0_99] : memref<1x4x256xf32, #tpu.memory_space<vmem>>, vector<1x4x256xf32>
    %190 = vector.shape_cast %189 : vector<1x4x256xf32> to vector<4x256xf32>
    %191 = vector.shape_cast %188 : vector<4x256xf32> to vector<1x4x256xf32>
    tpu.vector_store %arg5[%c0_97, %c0_98, %c0_99], %191 {strides = array<i32>} : memref<1x4x256xf32, #tpu.memory_space<vmem>>, vector<1x4x256xf32>,
    return
  }
  func.func @transform_0(%arg0: i32) -> (i32, i32, i32) {
    %c0_i32 = arith.constant 0 : i32
    %c0_i32_0 = arith.constant 0 : i32
    %c0_i32_1 = arith.constant 0 : i32
    return %arg0, %c0_i32, %c0_i32_0 : i32, i32, i32
  }
  func.func @transform_1(%arg0: i32) -> (i32, i32) {
    %c0_i32 = arith.constant 0 : i32
    %c0_i32_0 = arith.constant 0 : i32
    %c0_i32_1 = arith.constant 0 : i32
    return %c0_i32, %c0_i32_0 : i32, i32
  }
  func.func @transform_2(%arg0: i32) -> (i32, i32) {
    %c0_i32 = arith.constant 0 : i32
    %c0_i32_0 = arith.constant 0 : i32
    %c0_i32_1 = arith.constant 0 : i32
    return %c0_i32, %c0_i32_0 : i32, i32
  }
  func.func @transform_3(%arg0: i32) -> (i32, i32) {
    %c0_i32 = arith.constant 0 : i32
    %c0_i32_0 = arith.constant 0 : i32
    %c0_i32_1 = arith.constant 0 : i32
    return %c0_i32, %c0_i32_0 : i32, i32
  }
  func.func @transform_4(%arg0: i32) -> (i32, i32, i32) {
    %c0_i32 = arith.constant 0 : i32
    %c0_i32_0 = arith.constant 0 : i32
    %c0_i32_1 = arith.constant 0 : i32
    return %arg0, %c0_i32, %c0_i32_0 : i32, i32, i32
  }
}

</mosaic_0001>

<llo_original>
// kernel: multiscale_block.1
$region0: #{multiscale_block.1}
  #allocation0 [shape = 'u32[]', space=smem, size = 0x4, offset = 0x4, fixed_abs, tag = 'smem constant byte address 0x4 - core index']
  #allocation1 [shape = 'u32[72,128]{1,0:T(1,128)}', space=vmem, size = 0x9000, scoped, tag = 'internal scratch']
  #allocation2 [shape = 'bf16[4,358]{1,0:T(4,128)(2,1)}', space=vmem, size = 0xc00, scoped, tag = 'scratch operand']
  %s0 = inlined_call_operand.vmem [shape: f32[2,4,256], index: 0, kind: input, shape index: {}]
  %s1 = inlined_call_operand.vmem [shape: bf16[4,196], index: 1, kind: input, shape index: {}]
  %s2 = inlined_call_operand.vmem [shape: f32[4,1], index: 2, kind: input, shape index: {}]
  %s3 = inlined_call_operand.vmem [shape: s32[4,256], index: 3, kind: input, shape index: {}]
  %s4 = inlined_call_operand.vmem [shape: f32[2,4,256], index: 4, kind: output, shape index: {}]
  %s5 = sld [smem:[#allocation0]]
  $region49: #{multiscale_block.1} parent=0
    _
  %s7 = ssub.s32 1, %s5
  %s8 = scalar_select 0, %s7, %s5
  loop: start=0, step=1, limit=4
  $region2: #{multiscale_block.1} parent=0 // loop_pre_header
    _
  $region3: #{multiscale_block.1} parent=0 // loop_header
    %s10 = sphi 0, %s14
    %p11 = scmp.ge.s32.totalorder %s10, 4
    %s20 = sphi 0, %s22
    %s23 = sphi 0, %s20
    %s24 = sphi 0, %s23
    %s40 = sphi 0, %s24
    %s44 = sphi 0, %s44
    %s46 = sphi 0, %s44
    %s47 = sphi 0, %s46
    %s61 = sphi 0, %s47
    %s65 = sphi 0, %s65
    %s67 = sphi 0, %s65
    %s68 = sphi 0, %s67
    %s82 = sphi 0, %s68
    %s86 = sphi 0, %s86
    %s88 = sphi 0, %s86
    %s89 = sphi 0, %s88
    %s103 = sphi 0, %s89
    %s109 = sphi 0, %s111
    %s112 = sphi 0, %s109
    %s113 = sphi 0, %s112
    %s129 = sphi 0, %s113
  $region4: #{multiscale_block.1} parent=0 // loop_header_branch
    %13 = sbr.rel (%p11) target = $region8
  $region5: #{multiscale_block.1} parent=0 // loop_body
    %s15 = ssub.s32 %s10, 1
    %s16 = ssub.s32 %s10, 2
    %s17 = sadd.s32 %s10, 1
    %s18 = ssub.s32 %s10, %s17
    %p19 = scmp.eq.s32.totalorder %s18, 0
    %s21 = sadd.s32 %s20, 1
    %s22 = scalar_select %p19, %s20, %s21
    %p25 = pneg %p19
    %p26 = scmp.eq.s32.totalorder %s10, 1
    %p27 = por %p25, %p26
    %p28 = scmp.ne.s32.totalorder %s20, %s23
    %p29 = scmp.eq.s32.totalorder %s10, 0
    %p30 = por %p28, %p29
    %p31 = scmp.ne.s32.totalorder %s20, %s23
    %p32 = scmp.eq.s32.totalorder %s15, 1
    %p33 = por %p31, %p32
    %p34 = scmp.ne.s32.totalorder %s23, %s24
    %p35 = scmp.eq.s32.totalorder %s15, 0
    %p36 = por %p34, %p35
    %p37 = scmp.ne.s32.totalorder %s23, %s24
    %p38 = scmp.eq.s32.totalorder %s16, 1
    %p39 = por %p37, %p38
    %p41 = scmp.ne.s32.totalorder %s24, %s40
    %p42 = scmp.eq.s32.totalorder %s16, 0
    %p43 = por %p41, %p42
    %s45 = sadd.s32 %s44, 1
    %p48 = scmp.eq.s32.totalorder %s10, 1
    %p49 = scmp.ne.s32.totalorder %s44, %s46
    %p50 = scmp.eq.s32.totalorder %s10, 0
    %p51 = por %p49, %p50
    %p52 = scmp.ne.s32.totalorder %s44, %s46
    %p53 = scmp.eq.s32.totalorder %s15, 1
    %p54 = por %p52, %p53
    %p55 = scmp.ne.s32.totalorder %s46, %s47
    %p56 = scmp.eq.s32.totalorder %s15, 0
    %p57 = por %p55, %p56
    %p58 = scmp.ne.s32.totalorder %s46, %s47
    %p59 = scmp.eq.s32.totalorder %s16, 1
    %p60 = por %p58, %p59
    %p62 = scmp.ne.s32.totalorder %s47, %s61
    %p63 = scmp.eq.s32.totalorder %s16, 0
    %p64 = por %p62, %p63
    %s66 = sadd.s32 %s65, 1
    %p69 = scmp.eq.s32.totalorder %s10, 1
    %p70 = scmp.ne.s32.totalorder %s65, %s67
    %p71 = scmp.eq.s32.totalorder %s10, 0
    %p72 = por %p70, %p71
    %p73 = scmp.ne.s32.totalorder %s65, %s67
    %p74 = scmp.eq.s32.totalorder %s15, 1
    %p75 = por %p73, %p74
    %p76 = scmp.ne.s32.totalorder %s67, %s68
    %p77 = scmp.eq.s32.totalorder %s15, 0
    %p78 = por %p76, %p77
    %p79 = scmp.ne.s32.totalorder %s67, %s68
    %p80 = scmp.eq.s32.totalorder %s16, 1
    %p81 = por %p79, %p80
    %p83 = scmp.ne.s32.totalorder %s68, %s82
    %p84 = scmp.eq.s32.totalorder %s16, 0
    %p85 = por %p83, %p84
    %s87 = sadd.s32 %s86, 1
    %p90 = scmp.eq.s32.totalorder %s10, 1
    %p91 = scmp.ne.s32.totalorder %s86, %s88
    %p92 = scmp.eq.s32.totalorder %s10, 0
    %p93 = por %p91, %p92
    %p94 = scmp.ne.s32.totalorder %s86, %s88
    %p95 = scmp.eq.s32.totalorder %s15, 1
    %p96 = por %p94, %p95
    %p97 = scmp.ne.s32.totalorder %s88, %s89
    %p98 = scmp.eq.s32.totalorder %s15, 0
    %p99 = por %p97, %p98
    %p100 = scmp.ne.s32.totalorder %s88, %s89
    %p101 = scmp.eq.s32.totalorder %s16, 1
    %p102 = por %p100, %p101
    %p104 = scmp.ne.s32.totalorder %s89, %s103
    %p105 = scmp.eq.s32.totalorder %s16, 0
    %p106 = por %p104, %p105
    %s107 = ssub.s32 %s10, %s17
    %p108 = scmp.eq.s32.totalorder %s107, 0
    %s110 = sadd.s32 %s109, 1
    %s111 = scalar_select %p108, %s109, %s110
    %p114 = pneg %p108
    %p115 = scmp.eq.s32.totalorder %s10, 1
    %p116 = por %p114, %p115
    %p117 = scmp.ne.s32.totalorder %s109, %s112
    %p118 = scmp.eq.s32.totalorder %s10, 0
    %p119 = por %p117, %p118
    %p120 = scmp.ne.s32.totalorder %s109, %s112
    %p121 = scmp.eq.s32.totalorder %s15, 1
    %p122 = por %p120, %p121
    %p123 = scmp.ne.s32.totalorder %s112, %s113
    %p124 = scmp.eq.s32.totalorder %s15, 0
    %p125 = por %p123, %p124
    %p126 = scmp.ne.s32.totalorder %s112, %s113
    %p127 = scmp.eq.s32.totalorder %s16, 1
    %p128 = por %p126, %p127
    %p130 = scmp.ne.s32.totalorder %s113, %s129
    %p131 = scmp.eq.s32.totalorder %s16, 0
    %p132 = por %p130, %p131
    %p133 = scmp.le.s32.totalorder 1, %s10
    %p134 = scmp.lt.s32.totalorder %s10, 3
    %p135 = pnand %p133, %p134
    %p136 = pneg %p135
    // Predicated region
    $region9: #{multiscale_block.1} parent=5 // pred_check
      _
    $region10: #{multiscale_block.1} parent=5 // pred_check_branch
      %138 = sbr.rel (%p135) target = $region12
    $region11: #{multiscale_block.1} parent=5 // pred_region
      %s139 = ssub.s32 %s10, 1
      // Predicated region
      $region13: #{multiscale_block.1} parent=11 // pred_check
        %p140 = pneg %p57
      $region14: #{multiscale_block.1} parent=11 // pred_check_branch
        %142 = sbr.rel (%p140) target = $region16
      $region15: #{multiscale_block.1} parent=11 // pred_region
        _
      $region16: #{multiscale_block.1} parent=11 // pred_fallthru
        _
      // Predicated region
      $region17: #{multiscale_block.1} parent=11 // pred_check
        %p143 = pneg %p78
      $region18: #{multiscale_block.1} parent=11 // pred_check_branch
        %145 = sbr.rel (%p143) target = $region20
      $region19: #{multiscale_block.1} parent=11 // pred_region
        _
      $region20: #{multiscale_block.1} parent=11 // pred_fallthru
        _
      // Predicated region
      $region21: #{multiscale_block.1} parent=11 // pred_check
        %p146 = pneg %p99
      $region22: #{multiscale_block.1} parent=11 // pred_check_branch
        %148 = sbr.rel (%p146) target = $region24
      $region23: #{multiscale_block.1} parent=11 // pred_region
        _
      $region24: #{multiscale_block.1} parent=11 // pred_fallthru
        _
    $region12: #{multiscale_block.1} parent=5 // pred_fallthru
      _
    %p149 = scmp.lt.s32.totalorder %s10, 2
    // Predicated region
    $region25: #{multiscale_block.1} parent=5 // pred_check
      %p150 = pneg %p149
    $region26: #{multiscale_block.1} parent=5 // pred_check_branch
      %152 = sbr.rel (%p150) target = $region28
    $region27: #{multiscale_block.1} parent=5 // pred_region
      // Predicated region
      $region29: #{multiscale_block.1} parent=27 // pred_check
        %p153 = pneg %p30
      $region30: #{multiscale_block.1} parent=27 // pred_check_branch
        %155 = sbr.rel (%p153) target = $region32
      $region31: #{multiscale_block.1} parent=27 // pred_region
        %p156 = scmp.lt.s32.totalorder %s10, 1
        %s157 = scalar_select %p156, %s10, 1
        %s158 = smul.addr %s157, 2
        %s159 = smul.addr %s158, 4
        %s160 = scalar_lea.vmem %s0, %s159
      $region32: #{multiscale_block.1} parent=27 // pred_fallthru
        _
    $region28: #{multiscale_block.1} parent=5 // pred_fallthru
      _
    %p161 = scmp.le.s32.totalorder 1, %s10
    %p162 = scmp.lt.s32.totalorder %s10, 3
    %p163 = pnand %p161, %p162
    %p164 = pneg %p163
    // Predicated region
    $region33: #{multiscale_block.1} parent=5 // pred_check
      _
    $region34: #{multiscale_block.1} parent=5 // pred_check_branch
      %166 = sbr.rel (%p163) target = $region36
    $region35: #{multiscale_block.1} parent=5 // pred_region
      %s167 = ssub.s32 %s10, 1
      %p168 = scmp.lt.s32.totalorder %s15, 1
      %s169 = scalar_select %p168, %s15, 1
      %s170 = smul.addr %s169, 2
      %s171 = smul.addr %s170, 4
      %s172 = scalar_lea.vmem %s0, %s171
      %p173 = pneg %p36
      %p174 = pneg %p33
      %p175 = pneg %p57
      %p176 = pneg %p54
      %p177 = pneg %p78
      %p178 = pneg %p75
      %p179 = pneg %p99
      %p180 = pneg %p96
      %p181 = pneg %p125
      %p182 = pneg %p122
      %p183 = scmp.lt.s32.totalorder %s15, 1
      %s184 = scalar_select %p183, %s15, 1
      %s185 = smul.addr %s184, 2
      %s186 = smul.addr %s185, 4
      %s187 = scalar_lea.vmem %s4, %s186
      %p188 = scmp.lt.s32.totalorder %s15, 1
      %s189 = scalar_select %p188, %s15, 1
      %s190 = smul.addr %s189, 2
      %s191 = smul.addr %s190, 4
      %s192 = scalar_lea.vmem %s0, %s191
      %p193 = scmp.lt.s32.totalorder %s15, 1
      %s194 = scalar_select %p193, %s15, 1
      %s195 = smul.addr %s194, 2
      %s196 = smul.addr %s195, 4
      %s197 = scalar_lea.vmem %s4, %s196
      %vm201 = vcmask 410624
      %202 = vst.msk [vmem:[#allocation2] sm:$0x3] %vm201, 0
      %vm203 = vcmask 828824
      %204 = vst.msk [vmem:[#allocation2 + $0x4] sm:$0x3] %vm203, 0
      %v205 = vld [vmem:[%s192] sm:$0xff]
      %207 = vst [vmem:[#allocation1] ss:$2 sm:$0xff] %v205
      %v208 = vld.sshfl [vmem:[#allocation1] sm:$0xff pattern:$0x75316420]
      %v209 = vld.sshfl [vmem:[#allocation1 + $0x8] sm:$0xff pattern:$0x75316420]
      %v212 = vpack.c.bf16 %v209, %v208
      %v214 = vrot.slane %v212, 2
      %vm215 = vcmask 1041408
      %v218 = vsel %vm215, %v212, %v214
      %220 = vrot.lane.b32.xlu0 %v218, 51
      %v221 = vpop.permute.xlu0 %220
      %v222 = vrot.slane %v221, 6
      %vm223 = vcmask 416768
      %v224 = vsel %vm223, %v222, %v221
      %vm226 = vcmask 1041816
      %vm227 = vcmask 1043458
      %vm228 = vmor %vm227, %vm226
      %vm229 = vcmask 414724
      %vm230 = vmor %vm229, %vm228
      %231 = vst.msk [vmem:[#allocation2] sm:$0x3f] %vm230, %v224
      %v232 = vld [vmem:[%s3] sm:$0xff]
      %v233 = vadd.s32 %v232, 4294967293
      %vm234 = vcmp.ge.s32.totalorder %v233, 0
      %vm235 = vcmp.lt.s32.totalorder %v233, 16
      %vm236 = vmand %vm234, %vm235
      %v237 = vadd.s32 %v232, 4294967294
      %vm238 = vcmp.ge.s32.totalorder %v237, 0
      %vm239 = vcmp.lt.s32.totalorder %v237, 16
      %vm240 = vmand %vm238, %vm239
      %v241 = vadd.s32 %v232, 4294967295
      %vm242 = vcmp.ge.s32.totalorder %v241, 0
      %vm243 = vcmp.lt.s32.totalorder %v241, 16
      %vm244 = vmand %vm242, %vm243
      %v245 = vadd.s32 %v232, 1
      %vm246 = vcmp.ge.s32.totalorder %v245, 0
      %vm247 = vcmp.lt.s32.totalorder %v245, 16
      %vm248 = vmand %vm246, %vm247
      %v249 = vadd.s32 %v232, 2
      %vm250 = vcmp.ge.s32.totalorder %v249, 0
      %vm251 = vcmp.lt.s32.totalorder %v249, 16
      %vm252 = vmand %vm250, %vm251
      %v253 = vadd.s32 %v232, 3
      %vm254 = vcmp.ge.s32.totalorder %v253, 0
      %vm255 = vcmp.lt.s32.totalorder %v253, 16
      %vm256 = vmand %vm254, %vm255
      %v257 = vld [vmem:[#allocation2] sm:$0xf]
      %v258 = vsel %vm236, 1, 0
      %v259 = vpack.c.b16 %v258, %v258
      %v260 = vunpack.c.l.b16 %v259
      %v261 = vunpack.c.h.b16 %v259
      %v262 = vunpack.c.l.b16 0
      %v263 = vunpack.c.h.b16 0
      %vm264 = vcmp.ne.s32.totalorder %v260, %v262
      %vm265 = vcmp.ne.s32.totalorder %v261, %v263
      %vm266 = vmpackc.low %vm265, %vm264
      %v267 = vsel %vm266, %v257, 0
      %v268 = vld [vmem:[#allocation2] sm:$0x3f]
      %v269 = vsel %vm240, 1, 0
      %v270 = vpack.c.b16 %v269, %v269
      %v271 = vunpack.c.l.b16 %v270
      %v272 = vunpack.c.h.b16 %v270
      %v273 = vunpack.c.l.b16 0
      %v274 = vunpack.c.h.b16 0
      %vm275 = vcmp.ne.s32.totalorder %v271, %v273
      %vm276 = vcmp.ne.s32.totalorder %v272, %v274
      %vm277 = vmpackc.low %vm276, %vm275
      %v278 = vsel %vm277, 65537, 0
      %279 = vrot.lane.b32.xlu0 %v278, 1
      %v280 = vpop.permute.xlu0 %279
      %v281 = vrot.slane %v280, 6
      %vm282 = vcmask 7168
      %v283 = vsel %vm282, %v281, %v280
      %v284 = vunpack.c.l.b16 %v283
      %v285 = vunpack.c.h.b16 %v283
      %v286 = vunpack.c.l.b16 0
      %v287 = vunpack.c.h.b16 0
      %vm288 = vcmp.ne.s32.totalorder %v284, %v286
      %vm289 = vcmp.ne.s32.totalorder %v285, %v287
      %vm290 = vmpackc.low %vm289, %vm288
      %v291 = vsel %vm290, %v268, 0
      %v292 = vsel %vm244, 1, 0
      %v293 = vpack.c.b16 %v292, %v292
      %v294 = vunpack.c.l.b16 %v293
      %v295 = vunpack.c.h.b16 %v293
      %v296 = vunpack.c.l.b16 0
      %v297 = vunpack.c.h.b16 0
      %vm298 = vcmp.ne.s32.totalorder %v294, %v296
      %vm299 = vcmp.ne.s32.totalorder %v295, %v297
      %vm300 = vmpackc.low %vm299, %vm298
      %v301 = vsel %vm300, 65537, 0
      %302 = vrot.lane.b32.xlu0 %v301, 2
      %v303 = vpop.permute.xlu0 %302
      %v304 = vrot.slane %v303, 6
      %vm305 = vcmask 15360
      %v306 = vsel %vm305, %v304, %v303
      %v307 = vunpack.c.l.b16 %v306
      %v308 = vunpack.c.h.b16 %v306
      %v309 = vunpack.c.l.b16 0
      %v310 = vunpack.c.h.b16 0
      %vm311 = vcmp.ne.s32.totalorder %v307, %v309
      %vm312 = vcmp.ne.s32.totalorder %v308, %v310
      %vm313 = vmpackc.low %vm312, %vm311
      %v314 = vsel %vm313, %v268, 0
      %v315 = vsel %vm248, 1, 0
      %v316 = vpack.c.b16 %v315, %v315
      %v317 = vunpack.c.l.b16 %v316
      %v318 = vunpack.c.h.b16 %v316
      %v319 = vunpack.c.l.b16 0
      %v320 = vunpack.c.h.b16 0
      %vm321 = vcmp.ne.s32.totalorder %v317, %v319
      %vm322 = vcmp.ne.s32.totalorder %v318, %v320
      %vm323 = vmpackc.low %vm322, %vm321
      %v324 = vsel %vm323, 65537, 0
      %325 = vrot.lane.b32.xlu0 %v324, 4
      %v326 = vpop.permute.xlu0 %325
      %v327 = vrot.slane %v326, 6
      %vm328 = vcmask 31744
      %v329 = vsel %vm328, %v327, %v326
      %v330 = vunpack.c.l.b16 %v329
      %v331 = vunpack.c.h.b16 %v329
      %v332 = vunpack.c.l.b16 0
      %v333 = vunpack.c.h.b16 0
      %vm334 = vcmp.ne.s32.totalorder %v330, %v332
      %vm335 = vcmp.ne.s32.totalorder %v331, %v333
      %vm336 = vmpackc.low %vm335, %vm334
      %v337 = vsel %vm336, %v268, 0
      %v338 = vsel %vm252, 1, 0
      %v339 = vpack.c.b16 %v338, %v338
      %v340 = vunpack.c.l.b16 %v339
      %v341 = vunpack.c.h.b16 %v339
      %v342 = vunpack.c.l.b16 0
      %v343 = vunpack.c.h.b16 0
      %vm344 = vcmp.ne.s32.totalorder %v340, %v342
      %vm345 = vcmp.ne.s32.totalorder %v341, %v343
      %vm346 = vmpackc.low %vm345, %vm344
      %v347 = vsel %vm346, 65537, 0
      %348 = vrot.lane.b32.xlu0 %v347, 5
      %v349 = vpop.permute.xlu0 %348
      %v350 = vrot.slane %v349, 6
      %vm351 = vcmask 39936
      %v352 = vsel %vm351, %v350, %v349
      %v353 = vunpack.c.l.b16 %v352
      %v354 = vunpack.c.h.b16 %v352
      %v355 = vunpack.c.l.b16 0
      %v356 = vunpack.c.h.b16 0
      %vm357 = vcmp.ne.s32.totalorder %v353, %v355
      %vm358 = vcmp.ne.s32.totalorder %v354, %v356
      %vm359 = vmpackc.low %vm358, %vm357
      %v360 = vsel %vm359, %v268, 0
      %v361 = vsel %vm256, 1, 0
      %v362 = vpack.c.b16 %v361, %v361
      %v363 = vunpack.c.l.b16 %v362
      %v364 = vunpack.c.h.b16 %v362
      %v365 = vunpack.c.l.b16 0
      %v366 = vunpack.c.h.b16 0
      %vm367 = vcmp.ne.s32.totalorder %v363, %v365
      %vm368 = vcmp.ne.s32.totalorder %v364, %v366
      %vm369 = vmpackc.low %vm368, %vm367
      %v370 = vsel %vm369, 65537, 0
      %371 = vrot.lane.b32.xlu0 %v370, 6
      %v372 = vpop.permute.xlu0 %371
      %v373 = vrot.slane %v372, 6
      %vm374 = vcmask 48128
      %v375 = vsel %vm374, %v373, %v372
      %v376 = vunpack.c.l.b16 %v375
      %v377 = vunpack.c.h.b16 %v375
      %v378 = vunpack.c.l.b16 0
      %v379 = vunpack.c.h.b16 0
      %vm380 = vcmp.ne.s32.totalorder %v376, %v378
      %vm381 = vcmp.ne.s32.totalorder %v377, %v379
      %vm382 = vmpackc.low %vm381, %vm380
      %v383 = vsel %vm382, %v268, 0
      %385 = vst [vmem:[#allocation1] ss:$4 sm:$0xff] %v267
      %v386 = vld.sshfl [vmem:[#allocation1] sm:$0xff pattern:$0x73625140]
      %v387 = vld.sshfl [vmem:[#allocation1 + $0x8] sm:$0xff pattern:$0x73625140]
      %s389 = scalar_lea.vmem [#allocation1], 1
      %390 = vst [vmem:[%s389] ss:$4 sm:$0xff] %v291
      %v391 = vld.sshfl [vmem:[#allocation1] sm:$0xff pattern:$0x73625140]
      %v393 = vld.sshfl [vmem:[#allocation1 + $0x8] sm:$0xff pattern:$0x73625140]
      %v395 = vld.sshfl [vmem:[#allocation1 + $0x10] sm:$0xff pattern:$0x73625140]
      %397 = vrot.lane.b32.xlu0 %v391, 127
      %v398 = vpop.permute.xlu0 %397
      %399 = vrot.lane.b32.xlu0 %v393, 127
      %v400 = vpop.permute.xlu0 %399
      %401 = vrot.lane.b32.xlu0 %v395, 127
      %v402 = vpop.permute.xlu0 %401
      %vm403 = vcmask 1039360
      %v404 = vsel %vm403, %v398, %v400
      %v405 = vsel %vm403, %v400, %v402
      %s407 = scalar_lea.vmem [#allocation1], 2
      %408 = vst [vmem:[%s407] ss:$4 sm:$0xff] %v314
      %v409 = vld.sshfl [vmem:[#allocation1] sm:$0xff pattern:$0x73625140]
      %v411 = vld.sshfl [vmem:[#allocation1 + $0x8] sm:$0xff pattern:$0x73625140]
      %v413 = vld.sshfl [vmem:[#allocation1 + $0x10] sm:$0xff pattern:$0x73625140]
      %415 = vrot.lane.b32.xlu0 %v409, 126
      %v416 = vpop.permute.xlu0 %415
      %417 = vrot.lane.b32.xlu0 %v411, 126
      %v418 = vpop.permute.xlu0 %417
      %419 = vrot.lane.b32.xlu0 %v413, 126
      %v420 = vpop.permute.xlu0 %419
      %vm421 = vcmask 1031168
      %v422 = vsel %vm421, %v416, %v418
      %v423 = vsel %vm421, %v418, %v420
      %s425 = scalar_lea.vmem [#allocation1], 3
      %426 = vst [vmem:[%s425] ss:$4 sm:$0xff] %v268
      %v427 = vld.sshfl [vmem:[#allocation1] sm:$0xff pattern:$0x73625140]
      %v429 = vld.sshfl [vmem:[#allocation1 + $0x8] sm:$0xff pattern:$0x73625140]
      %v431 = vld.sshfl [vmem:[#allocation1 + $0x10] sm:$0xff pattern:$0x73625140]
      %433 = vrot.lane.b32.xlu0 %v427, 125
      %v434 = vpop.permute.xlu0 %433
      %435 = vrot.lane.b32.xlu0 %v429, 125
      %v436 = vpop.permute.xlu0 %435
      %437 = vrot.lane.b32.xlu0 %v431, 125
      %v438 = vpop.permute.xlu0 %437
      %vm439 = vcmask 1022976
      %v440 = vsel %vm439, %v434, %v436
      %v441 = vsel %vm439, %v436, %v438
      %443 = vst [vmem:[#allocation1] ss:$4 sm:$0xff] %v337
      %v444 = vld.sshfl [vmem:[#allocation1] sm:$0xff pattern:$0x73625140]
      %v446 = vld.sshfl [vmem:[#allocation1 + $0x8] sm:$0xff pattern:$0x73625140]
      %v448 = vld.sshfl [vmem:[#allocation1 + $0x10] sm:$0xff pattern:$0x73625140]
      %450 = vrot.lane.b32.xlu0 %v444, 124
      %v451 = vpop.permute.xlu0 %450
      %452 = vrot.lane.b32.xlu0 %v446, 124
      %v453 = vpop.permute.xlu0 %452
      %454 = vrot.lane.b32.xlu0 %v448, 124
      %v455 = vpop.permute.xlu0 %454
      %vm456 = vcmask 1014784
      %v457 = vsel %vm456, %v451, %v453
      %v458 = vsel %vm456, %v453, %v455
      %s460 = scalar_lea.vmem [#allocation1], 1
      %461 = vst [vmem:[%s460] ss:$4 sm:$0xff] %v360
      %v462 = vld.sshfl [vmem:[#allocation1] sm:$0xff pattern:$0x73625140]
      %v464 = vld.sshfl [vmem:[#allocation1 + $0x8] sm:$0xff pattern:$0x73625140]
      %v466 = vld.sshfl [vmem:[#allocation1 + $0x10] sm:$0xff pattern:$0x73625140]
      %468 = vrot.lane.b32.xlu0 %v462, 123
      %v469 = vpop.permute.xlu0 %468
      %470 = vrot.lane.b32.xlu0 %v464, 123
      %v471 = vpop.permute.xlu0 %470
      %472 = vrot.lane.b32.xlu0 %v466, 123
      %v473 = vpop.permute.xlu0 %472
      %vm474 = vcmask 1006592
      %v475 = vsel %vm474, %v469, %v471
      %v476 = vsel %vm474, %v471, %v473
      %s478 = scalar_lea.vmem [#allocation1], 2
      %479 = vst [vmem:[%s478] ss:$4 sm:$0xff] %v383
      %v480 = vld.sshfl [vmem:[#allocation1] sm:$0xff pattern:$0x73625140]
      %v482 = vld.sshfl [vmem:[#allocation1 + $0x8] sm:$0xff pattern:$0x73625140]
      %v484 = vld.sshfl [vmem:[#allocation1 + $0x10] sm:$0xff pattern:$0x73625140]
      %486 = vrot.lane.b32.xlu0 %v480, 122
      %v487 = vpop.permute.xlu0 %486
      %488 = vrot.lane.b32.xlu0 %v482, 122
      %v489 = vpop.permute.xlu0 %488
      %490 = vrot.lane.b32.xlu0 %v484, 122
      %v491 = vpop.permute.xlu0 %490
      %vm492 = vcmask 998400
      %v493 = vsel %vm492, %v487, %v489
      %v494 = vsel %vm492, %v489, %v491
      %v496 = vsel %vm215, %v386, %v404
      %v498 = vsel %vm215, %v387, %v405
      %vm499 = vcmask 1043456
      %v501 = vsel %vm499, %v496, %v422
      %v503 = vsel %vm499, %v498, %v423
      %vm504 = vcmask 1045504
      %v506 = vsel %vm504, %v501, %v440
      %v509 = vsel %vm504, %v503, %v441
      %v513 = vsel %vm215, %v457, %v475
      %v516 = vsel %vm215, %v458, %v476
      %v518 = vsel %vm499, %v513, %v493
      %v520 = vsel %vm499, %v516, %v494
      %v521 = vld [vmem:[%s1] sm:$0x3]
      %v522 = vld [vmem:[#allocation2] sm:$0x3f]
      %v523 = vsel %vm266, 65537, 0
      %524 = vrot.lane.b32.xlu0 %v523, 16
      %v525 = vpop.permute.xlu0 %524
      %v526 = vrot.slane %v525, 6
      %vm527 = vcmask 130048
      %v528 = vsel %vm527, %v526, %v525
      %v529 = vunpack.c.l.b16 %v528
      %v530 = vunpack.c.h.b16 %v528
      %v531 = vunpack.c.l.b16 0
      %v532 = vunpack.c.h.b16 0
      %vm533 = vcmp.ne.s32.totalorder %v529, %v531
      %vm534 = vcmp.ne.s32.totalorder %v530, %v532
      %vm535 = vmpackc.low %vm534, %vm533
      %v536 = vsel %vm535, %v522, 0
      %537 = vrot.lane.b32.xlu0 %v278, 17
      %v538 = vpop.permute.xlu0 %537
      %v539 = vrot.slane %v538, 6
      %vm540 = vcmask 138240
      %v541 = vsel %vm540, %v539, %v538
      %v542 = vunpack.c.l.b16 %v541
      %v543 = vunpack.c.h.b16 %v541
      %v544 = vunpack.c.l.b16 0
      %v545 = vunpack.c.h.b16 0
      %vm546 = vcmp.ne.s32.totalorder %v542, %v544
      %vm547 = vcmp.ne.s32.totalorder %v543, %v545
      %vm548 = vmpackc.low %vm547, %vm546
      %v549 = vsel %vm548, %v522, 0
      %550 = vrot.lane.b32.xlu0 %v301, 18
      %v551 = vpop.permute.xlu0 %550
      %v552 = vrot.slane %v551, 6
      %vm553 = vcmask 146432
      %v554 = vsel %vm553, %v552, %v551
      %v555 = vunpack.c.l.b16 %v554
      %v556 = vunpack.c.h.b16 %v554
      %v557 = vunpack.c.l.b16 0
      %v558 = vunpack.c.h.b16 0
      %vm559 = vcmp.ne.s32.totalorder %v555, %v557
      %vm560 = vcmp.ne.s32.totalorder %v556, %v558
      %vm561 = vmpackc.low %vm560, %vm559
      %v562 = vsel %vm561, %v522, 0
      %563 = vrot.lane.b32.xlu0 %v324, 20
      %v564 = vpop.permute.xlu0 %563
      %v565 = vrot.slane %v564, 6
      %vm566 = vcmask 162816
      %v567 = vsel %vm566, %v565, %v564
      %v568 = vunpack.c.l.b16 %v567
      %v569 = vunpack.c.h.b16 %v567
      %v570 = vunpack.c.l.b16 0
      %v571 = vunpack.c.h.b16 0
      %vm572 = vcmp.ne.s32.totalorder %v568, %v570
      %vm573 = vcmp.ne.s32.totalorder %v569, %v571
      %vm574 = vmpackc.low %vm573, %vm572
      %v575 = vsel %vm574, %v522, 0
      %576 = vrot.lane.b32.xlu0 %v347, 21
      %v577 = vpop.permute.xlu0 %576
      %v578 = vrot.slane %v577, 6
      %vm579 = vcmask 171008
      %v580 = vsel %vm579, %v578, %v577
      %v581 = vunpack.c.l.b16 %v580
      %v582 = vunpack.c.h.b16 %v580
      %v583 = vunpack.c.l.b16 0
      %v584 = vunpack.c.h.b16 0
      %vm585 = vcmp.ne.s32.totalorder %v581, %v583
      %vm586 = vcmp.ne.s32.totalorder %v582, %v584
      %vm587 = vmpackc.low %vm586, %vm585
      %v588 = vsel %vm587, %v522, 0
      %589 = vrot.lane.b32.xlu0 %v370, 22
      %v590 = vpop.permute.xlu0 %589
      %v591 = vrot.slane %v590, 6
      %vm592 = vcmask 179200
      %v593 = vsel %vm592, %v591, %v590
      %v594 = vunpack.c.l.b16 %v593
      %v595 = vunpack.c.h.b16 %v593
      %v596 = vunpack.c.l.b16 0
      %v597 = vunpack.c.h.b16 0
      %vm598 = vcmp.ne.s32.totalorder %v594, %v596
      %vm599 = vcmp.ne.s32.totalorder %v595, %v597
      %vm600 = vmpackc.low %vm599, %vm598
      %v601 = vsel %vm600, %v522, 0
      %603 = vst [vmem:[#allocation1] ss:$4 sm:$0xff] %v536
      %v604 = vld.sshfl [vmem:[#allocation1] sm:$0xff pattern:$0x73625140]
      %v605 = vld.sshfl [vmem:[#allocation1 + $0x8] sm:$0xff pattern:$0x73625140]
      %v606 = vld.sshfl [vmem:[#allocation1 + $0x10] sm:$0xff pattern:$0x73625140]
      %s608 = scalar_lea.vmem [#allocation1], 1
      %609 = vst [vmem:[%s608] ss:$4 sm:$0xff] %v549
      %v610 = vld.sshfl [vmem:[#allocation1] sm:$0xff pattern:$0x73625140]
      %v612 = vld.sshfl [vmem:[#allocation1 + $0x8] sm:$0xff pattern:$0x73625140]
      %v614 = vld.sshfl [vmem:[#allocation1 + $0x10] sm:$0xff pattern:$0x73625140]
      %616 = vrot.lane.b32.xlu0 %v610, 127
      %v617 = vpop.permute.xlu0 %616
      %618 = vrot.lane.b32.xlu0 %v612, 127
      %v619 = vpop.permute.xlu0 %618
      %620 = vrot.lane.b32.xlu0 %v614, 127
      %v621 = vpop.permute.xlu0 %620
      %v622 = vsel %vm403, %v617, %v619
      %v623 = vsel %vm403, %v619, %v621
      %s625 = scalar_lea.vmem [#allocation1], 2
      %626 = vst [vmem:[%s625] ss:$4 sm:$0xff] %v562
      %v627 = vld.sshfl [vmem:[#allocation1] sm:$0xff pattern:$0x73625140]
      %v629 = vld.sshfl [vmem:[#allocation1 + $0x8] sm:$0xff pattern:$0x73625140]
      %v631 = vld.sshfl [vmem:[#allocation1 + $0x10] sm:$0xff pattern:$0x73625140]
      %633 = vrot.lane.b32.xlu0 %v627, 126
      %v634 = vpop.permute.xlu0 %633
      %635 = vrot.lane.b32.xlu0 %v629, 126
      %v636 = vpop.permute.xlu0 %635
      %637 = vrot.lane.b32.xlu0 %v631, 126
      %v638 = vpop.permute.xlu0 %637
      %v639 = vsel %vm421, %v634, %v636
      %v640 = vsel %vm421, %v636, %v638
      %s642 = scalar_lea.vmem [#allocation1], 3
      %643 = vst [vmem:[%s642] ss:$4 sm:$0xff] %v522
      %v644 = vld.sshfl [vmem:[#allocation1] sm:$0xff pattern:$0x73625140]
      %v646 = vld.sshfl [vmem:[#allocation1 + $0x8] sm:$0xff pattern:$0x73625140]
      %v648 = vld.sshfl [vmem:[#allocation1 + $0x10] sm:$0xff pattern:$0x73625140]
      %650 = vrot.lane.b32.xlu0 %v644, 125
      %v651 = vpop.permute.xlu0 %650
      %652 = vrot.lane.b32.xlu0 %v646, 125
      %v653 = vpop.permute.xlu0 %652
      %654 = vrot.lane.b32.xlu0 %v648, 125
      %v655 = vpop.permute.xlu0 %654
      %v656 = vsel %vm439, %v651, %v653
      %v657 = vsel %vm439, %v653, %v655
      %659 = vst [vmem:[#allocation1] ss:$4 sm:$0xff] %v575
      %v660 = vld.sshfl [vmem:[#allocation1] sm:$0xff pattern:$0x73625140]
      %v662 = vld.sshfl [vmem:[#allocation1 + $0x8] sm:$0xff pattern:$0x73625140]
      %v664 = vld.sshfl [vmem:[#allocation1 + $0x10] sm:$0xff pattern:$0x73625140]
      %666 = vrot.lane.b32.xlu0 %v660, 124
      %v667 = vpop.permute.xlu0 %666
      %668 = vrot.lane.b32.xlu0 %v662, 124
      %v669 = vpop.permute.xlu0 %668
      %670 = vrot.lane.b32.xlu0 %v664, 124
      %v671 = vpop.permute.xlu0 %670
      %v672 = vsel %vm456, %v667, %v669
      %v673 = vsel %vm456, %v669, %v671
      %s675 = scalar_lea.vmem [#allocation1], 1
      %676 = vst [vmem:[%s675] ss:$4 sm:$0xff] %v588
      %v677 = vld.sshfl [vmem:[#allocation1] sm:$0xff pattern:$0x73625140]
      %v679 = vld.sshfl [vmem:[#allocation1 + $0x8] sm:$0xff pattern:$0x73625140]
      %v681 = vld.sshfl [vmem:[#allocation1 + $0x10] sm:$0xff pattern:$0x73625140]
      %683 = vrot.lane.b32.xlu0 %v677, 123
      %v684 = vpop.permute.xlu0 %683
      %685 = vrot.lane.b32.xlu0 %v679, 123
      %v686 = vpop.permute.xlu0 %685
      %687 = vrot.lane.b32.xlu0 %v681, 123
      %v688 = vpop.permute.xlu0 %687
      %v689 = vsel %vm474, %v684, %v686
      %v690 = vsel %vm474, %v686, %v688
      %s692 = scalar_lea.vmem [#allocation1], 2
      %693 = vst [vmem:[%s692] ss:$4 sm:$0xff] %v601
      %v694 = vld.sshfl [vmem:[#allocation1] sm:$0xff pattern:$0x73625140]
      %v696 = vld.sshfl [vmem:[#allocation1 + $0x8] sm:$0xff pattern:$0x73625140]
      %v698 = vld.sshfl [vmem:[#allocation1 + $0x10] sm:$0xff pattern:$0x73625140]
      %700 = vrot.lane.b32.xlu0 %v694, 122
      %v701 = vpop.permute.xlu0 %700
      %702 = vrot.lane.b32.xlu0 %v696, 122
      %v703 = vpop.permute.xlu0 %702
      %704 = vrot.lane.b32.xlu0 %v698, 122
      %v705 = vpop.permute.xlu0 %704
      %v706 = vsel %vm492, %v701, %v703
      %v707 = vsel %vm492, %v703, %v705
      %v709 = vsel %vm215, %v604, %v622
      %v711 = vsel %vm215, %v605, %v623
      %v713 = vsel %vm215, %v606, %v621
      %v715 = vsel %vm499, %v709, %v639
      %v717 = vsel %vm499, %v711, %v640
      %v719 = vsel %vm499, %v713, %v638
      %v721 = vsel %vm504, %v715, %v656
      %v723 = vsel %vm504, %v717, %v657
      %v725 = vsel %vm504, %v719, %v655
      %v728 = vsel %vm215, %v672, %v689
      %v731 = vsel %vm215, %v673, %v690
      %v734 = vsel %vm215, %v671, %v688
      %v736 = vsel %vm499, %v728, %v706
      %v738 = vsel %vm499, %v731, %v707
      %v740 = vsel %vm499, %v734, %v705
      %v741 = vld [vmem:[%s1] sm:$0x3]
      %743 = vst [vmem:[#allocation1] ss:$4 sm:$0xff] %v741
      %v744 = vld.sshfl [vmem:[#allocation1] sm:$0xff pattern:$0x73625140]
      %746 = vrot.lane.b32.xlu0 %v744, 100
      %v747 = vpop.permute.xlu0 %746
      %754 = vrot.lane.b32.xlu0 %v721, 112
      %v755 = vpop.permute.xlu0 %754
      %756 = vrot.lane.b32.xlu0 %v723, 112
      %v757 = vpop.permute.xlu0 %756
      %758 = vrot.lane.b32.xlu0 %v725, 112
      %v759 = vpop.permute.xlu0 %758
      %760 = vrot.lane.b32.xlu0 %v736, 112
      %v761 = vpop.permute.xlu0 %760
      %762 = vrot.lane.b32.xlu0 %v738, 112
      %v763 = vpop.permute.xlu0 %762
      %764 = vrot.lane.b32.xlu0 %v740, 112
      %v765 = vpop.permute.xlu0 %764
      %vm766 = vcmask 916480
      %v767 = vsel %vm766, %v755, %v757
      %v768 = vsel %vm766, %v757, %v759
      %v769 = vsel %vm766, %v761, %v763
      %v770 = vsel %vm766, %v763, %v765
      %vm773 = vcmask 228352
      %v775 = vsel %vm773, %v747, 0
      %v778 = vsel %vm504, %v769, 0
      %v781 = vsel %vm504, %v770, 0
      %783 = vmatpush.bf16.msra.mxu0 0
      %784 = vmatpush.bf16.msra.mxu0 0
      %785 = vmatpush.bf16.msra.mxu0 0
      %786 = vmatpush.bf16.msra.mxu0 0
      %787 = vmatpush.bf16.msra.mxu0 0
      %788 = vmatpush.bf16.msra.mxu0 0
      %789 = vmatpush.bf16.msra.mxu0 %v778
      %790 = vmatpush.bf16.msra.mxu0 %v767
      %791 = vmatmul.bf16.gmra.mxu0 %v775
      %v792 = vpop.f32.mrf.mxu0
      %v793 = vadd.f32 0.0, %v792
      %v794 = vpop.f32.mrf.mxu0
      %795 = vdwg.mxu0
      %796 = vmatpush.bf16.msra.mxu0 0
      %797 = vmatpush.bf16.msra.mxu0 0
      %798 = vmatpush.bf16.msra.mxu0 0
      %799 = vmatpush.bf16.msra.mxu0 0
      %800 = vmatpush.bf16.msra.mxu0 0
      %801 = vmatpush.bf16.msra.mxu0 0
      %802 = vmatpush.bf16.msra.mxu0 %v781
      %803 = vmatpush.bf16.msra.mxu0 %v768
      %804 = vmatmul.bf16.gmra.mxu0 %v775
      %v805 = vpop.f32.mrf.mxu0
      %v806 = vadd.f32 0.0, %v805
      %v807 = vpop.f32.mrf.mxu0
      %808 = vdwg.mxu0
      %v810 = vsel %vm773, %v521, 0
      %v812 = vsel %vm504, %v518, 0
      %v814 = vsel %vm504, %v520, 0
      %816 = vmatpush.bf16.msra.mxu0 0
      %817 = vmatpush.bf16.msra.mxu0 0
      %818 = vmatpush.bf16.msra.mxu0 0
      %819 = vmatpush.bf16.msra.mxu0 0
      %820 = vmatpush.bf16.msra.mxu0 0
      %821 = vmatpush.bf16.msra.mxu0 0
      %822 = vmatpush.bf16.msra.mxu0 %v812
      %823 = vmatpush.bf16.msra.mxu0 %v506
      %824 = vmatmul.bf16.gmra.mxu0 %v810
      %v825 = vpop.f32.mrf.mxu0
      %v826 = vadd.f32 %v793, %v825
      %v827 = vpop.f32.mrf.mxu0
      %828 = vdwg.mxu0
      %829 = vmatpush.bf16.msra.mxu0 0
      %830 = vmatpush.bf16.msra.mxu0 0
      %831 = vmatpush.bf16.msra.mxu0 0
      %832 = vmatpush.bf16.msra.mxu0 0
      %833 = vmatpush.bf16.msra.mxu0 0
      %834 = vmatpush.bf16.msra.mxu0 0
      %835 = vmatpush.bf16.msra.mxu0 %v814
      %836 = vmatpush.bf16.msra.mxu0 %v509
      %837 = vmatmul.bf16.gmra.mxu0 %v810
      %v838 = vpop.f32.mrf.mxu0
      %v839 = vadd.f32 %v806, %v838
      %v840 = vpop.f32.mrf.mxu0
      %841 = vdwg.mxu0
      %v842 = vld [vmem:[#allocation2] sm:$0x3f]
      %843 = vrot.lane.b32.xlu0 %v523, 32
      %v844 = vpop.permute.xlu0 %843
      %v845 = vrot.slane %v844, 6
      %vm846 = vcmask 261120
      %v847 = vsel %vm846, %v845, %v844
      %v848 = vunpack.c.l.b16 %v847
      %v849 = vunpack.c.h.b16 %v847
      %v850 = vunpack.c.l.b16 0
      %v851 = vunpack.c.h.b16 0
      %vm852 = vcmp.ne.s32.totalorder %v848, %v850
      %vm853 = vcmp.ne.s32.totalorder %v849, %v851
      %vm854 = vmpackc.low %vm853, %vm852
      %v855 = vsel %vm854, %v842, 0
      %856 = vrot.lane.b32.xlu0 %v278, 33
      %v857 = vpop.permute.xlu0 %856
      %v858 = vrot.slane %v857, 6
      %vm859 = vcmask 269312
      %v860 = vsel %vm859, %v858, %v857
      %v861 = vunpack.c.l.b16 %v860
      %v862 = vunpack.c.h.b16 %v860
      %v863 = vunpack.c.l.b16 0
      %v864 = vunpack.c.h.b16 0
      %vm865 = vcmp.ne.s32.totalorder %v861, %v863
      %vm866 = vcmp.ne.s32.totalorder %v862, %v864
      %vm867 = vmpackc.low %vm866, %vm865
      %v868 = vsel %vm867, %v842, 0
      %869 = vrot.lane.b32.xlu0 %v301, 34
      %v870 = vpop.permute.xlu0 %869
      %v871 = vrot.slane %v870, 6
      %vm872 = vcmask 277504
      %v873 = vsel %vm872, %v871, %v870
      %v874 = vunpack.c.l.b16 %v873
      %v875 = vunpack.c.h.b16 %v873
      %v876 = vunpack.c.l.b16 0
      %v877 = vunpack.c.h.b16 0
      %vm878 = vcmp.ne.s32.totalorder %v874, %v876
      %vm879 = vcmp.ne.s32.totalorder %v875, %v877
      %vm880 = vmpackc.low %vm879, %vm878
      %v881 = vsel %vm880, %v842, 0
      %882 = vrot.lane.b32.xlu0 %v324, 36
      %v883 = vpop.permute.xlu0 %882
      %v884 = vrot.slane %v883, 6
      %vm885 = vcmask 293888
      %v886 = vsel %vm885, %v884, %v883
      %v887 = vunpack.c.l.b16 %v886
      %v888 = vunpack.c.h.b16 %v886
      %v889 = vunpack.c.l.b16 0
      %v890 = vunpack.c.h.b16 0
      %vm891 = vcmp.ne.s32.totalorder %v887, %v889
      %vm892 = vcmp.ne.s32.totalorder %v888, %v890
      %vm893 = vmpackc.low %vm892, %vm891
      %v894 = vsel %vm893, %v842, 0
      %895 = vrot.lane.b32.xlu0 %v347, 37
      %v896 = vpop.permute.xlu0 %895
      %v897 = vrot.slane %v896, 6
      %vm898 = vcmask 302080
      %v899 = vsel %vm898, %v897, %v896
      %v900 = vunpack.c.l.b16 %v899
      %v901 = vunpack.c.h.b16 %v899
      %v902 = vunpack.c.l.b16 0
      %v903 = vunpack.c.h.b16 0
      %vm904 = vcmp.ne.s32.totalorder %v900, %v902
      %vm905 = vcmp.ne.s32.totalorder %v901, %v903
      %vm906 = vmpackc.low %vm905, %vm904
      %v907 = vsel %vm906, %v842, 0
      %908 = vrot.lane.b32.xlu0 %v370, 38
      %v909 = vpop.permute.xlu0 %908
      %v910 = vrot.slane %v909, 6
      %vm911 = vcmask 310272
      %v912 = vsel %vm911, %v910, %v909
      %v913 = vunpack.c.l.b16 %v912
      %v914 = vunpack.c.h.b16 %v912
      %v915 = vunpack.c.l.b16 0
      %v916 = vunpack.c.h.b16 0
      %vm917 = vcmp.ne.s32.totalorder %v913, %v915
      %vm918 = vcmp.ne.s32.totalorder %v914, %v916
      %vm919 = vmpackc.low %vm918, %vm917
      %v920 = vsel %vm919, %v842, 0
      %922 = vst [vmem:[#allocation1] ss:$4 sm:$0xff] %v855
      %v923 = vld.sshfl [vmem:[#allocation1] sm:$0xff pattern:$0x73625140]
      %v924 = vld.sshfl [vmem:[#allocation1 + $0x8] sm:$0xff pattern:$0x73625140]
      %v925 = vld.sshfl [vmem:[#allocation1 + $0x10] sm:$0xff pattern:$0x73625140]
      %s927 = scalar_lea.vmem [#allocation1], 1
      %928 = vst [vmem:[%s927] ss:$4 sm:$0xff] %v868
      %v929 = vld.sshfl [vmem:[#allocation1] sm:$0xff pattern:$0x73625140]
      %v931 = vld.sshfl [vmem:[#allocation1 + $0x8] sm:$0xff pattern:$0x73625140]
      %v933 = vld.sshfl [vmem:[#allocation1 + $0x10] sm:$0xff pattern:$0x73625140]
      %935 = vrot.lane.b32.xlu0 %v929, 127
      %v936 = vpop.permute.xlu0 %935
      %937 = vrot.lane.b32.xlu0 %v931, 127
      %v938 = vpop.permute.xlu0 %937
      %939 = vrot.lane.b32.xlu0 %v933, 127
      %v940 = vpop.permute.xlu0 %939
      %v941 = vsel %vm403, %v936, %v938
      %v942 = vsel %vm403, %v938, %v940
      %s944 = scalar_lea.vmem [#allocation1], 2
      %945 = vst [vmem:[%s944] ss:$4 sm:$0xff] %v881
      %v946 = vld.sshfl [vmem:[#allocation1] sm:$0xff pattern:$0x73625140]
      %v948 = vld.sshfl [vmem:[#allocation1 + $0x8] sm:$0xff pattern:$0x73625140]
      %v950 = vld.sshfl [vmem:[#allocation1 + $0x10] sm:$0xff pattern:$0x73625140]
      %952 = vrot.lane.b32.xlu0 %v946, 126
      %v953 = vpop.permute.xlu0 %952
      %954 = vrot.lane.b32.xlu0 %v948, 126
      %v955 = vpop.permute.xlu0 %954
      %956 = vrot.lane.b32.xlu0 %v950, 126
      %v957 = vpop.permute.xlu0 %956
      %v958 = vsel %vm421, %v953, %v955
      %v959 = vsel %vm421, %v955, %v957
      %s961 = scalar_lea.vmem [#allocation1], 3
      %962 = vst [vmem:[%s961] ss:$4 sm:$0xff] %v842
      %v963 = vld.sshfl [vmem:[#allocation1] sm:$0xff pattern:$0x73625140]
      %v965 = vld.sshfl [vmem:[#allocation1 + $0x8] sm:$0xff pattern:$0x73625140]
      %v967 = vld.sshfl [vmem:[#allocation1 + $0x10] sm:$0xff pattern:$0x73625140]
      %969 = vrot.lane.b32.xlu0 %v963, 125
      %v970 = vpop.permute.xlu0 %969
      %971 = vrot.lane.b32.xlu0 %v965, 125
      %v972 = vpop.permute.xlu0 %971
      %973 = vrot.lane.b32.xlu0 %v967, 125
      %v974 = vpop.permute.xlu0 %973
      %v975 = vsel %vm439, %v970, %v972
      %v976 = vsel %vm439, %v972, %v974
      %978 = vst [vmem:[#allocation1] ss:$4 sm:$0xff] %v894
      %v979 = vld.sshfl [vmem:[#allocation1] sm:$0xff pattern:$0x73625140]
      %v981 = vld.sshfl [vmem:[#allocation1 + $0x8] sm:$0xff pattern:$0x73625140]
      %v983 = vld.sshfl [vmem:[#allocation1 + $0x10] sm:$0xff pattern:$0x73625140]
      %985 = vrot.lane.b32.xlu0 %v979, 124
      %v986 = vpop.permute.xlu0 %985
      %987 = vrot.lane.b32.xlu0 %v981, 124
      %v988 = vpop.permute.xlu0 %987
      %989 = vrot.lane.b32.xlu0 %v983, 124
      %v990 = vpop.permute.xlu0 %989
      %v991 = vsel %vm456, %v986, %v988
      %v992 = vsel %vm456, %v988, %v990
      %s994 = scalar_lea.vmem [#allocation1], 1
      %995 = vst [vmem:[%s994] ss:$4 sm:$0xff] %v907
      %v996 = vld.sshfl [vmem:[#allocation1] sm:$0xff pattern:$0x73625140]
      %v998 = vld.sshfl [vmem:[#allocation1 + $0x8] sm:$0xff pattern:$0x73625140]
      %v1000 = vld.sshfl [vmem:[#allocation1 + $0x10] sm:$0xff pattern:$0x73625140]
      %1002 = vrot.lane.b32.xlu0 %v996, 123
      %v1003 = vpop.permute.xlu0 %1002
      %1004 = vrot.lane.b32.xlu0 %v998, 123
      %v1005 = vpop.permute.xlu0 %1004
      %1006 = vrot.lane.b32.xlu0 %v1000, 123
      %v1007 = vpop.permute.xlu0 %1006
      %v1008 = vsel %vm474, %v1003, %v1005
      %v1009 = vsel %vm474, %v1005, %v1007
      %s1011 = scalar_lea.vmem [#allocation1], 2
      %1012 = vst [vmem:[%s1011] ss:$4 sm:$0xff] %v920
      %v1013 = vld.sshfl [vmem:[#allocation1] sm:$0xff pattern:$0x73625140]
      %v1015 = vld.sshfl [vmem:[#allocation1 + $0x8] sm:$0xff pattern:$0x73625140]
      %v1017 = vld.sshfl [vmem:[#allocation1 + $0x10] sm:$0xff pattern:$0x73625140]
      %1019 = vrot.lane.b32.xlu0 %v1013, 122
      %v1020 = vpop.permute.xlu0 %1019
      %1021 = vrot.lane.b32.xlu0 %v1015, 122
      %v1022 = vpop.permute.xlu0 %1021
      %1023 = vrot.lane.b32.xlu0 %v1017, 122
      %v1024 = vpop.permute.xlu0 %1023
      %v1025 = vsel %vm492, %v1020, %v1022
      %v1026 = vsel %vm492, %v1022, %v1024
      %v1028 = vsel %vm215, %v923, %v941
      %v1030 = vsel %vm215, %v924, %v942
      %v1032 = vsel %vm215, %v925, %v940
      %v1034 = vsel %vm499, %v1028, %v958
      %v1036 = vsel %vm499, %v1030, %v959
      %v1038 = vsel %vm499, %v1032, %v957
      %v1040 = vsel %vm504, %v1034, %v975
      %v1042 = vsel %vm504, %v1036, %v976
      %v1044 = vsel %vm504, %v1038, %v974
      %v1047 = vsel %vm215, %v991, %v1008
      %v1050 = vsel %vm215, %v992, %v1009
      %v1053 = vsel %vm215, %v990, %v1007
      %v1055 = vsel %vm499, %v1047, %v1025
      %v1057 = vsel %vm499, %v1050, %v1026
      %v1059 = vsel %vm499, %v1053, %v1024
      %v1060 = vld [vmem:[%s1] sm:$0x3]
      %1062 = vst [vmem:[#allocation1] ss:$4 sm:$0xff] %v1060
      %v1063 = vld.sshfl [vmem:[#allocation1] sm:$0xff pattern:$0x73625140]
      %1065 = vrot.lane.b32.xlu0 %v1063, 72
      %v1066 = vpop.permute.xlu0 %1065
      %1073 = vrot.lane.b32.xlu0 %v1040, 96
      %v1074 = vpop.permute.xlu0 %1073
      %1075 = vrot.lane.b32.xlu0 %v1042, 96
      %v1076 = vpop.permute.xlu0 %1075
      %1077 = vrot.lane.b32.xlu0 %v1044, 96
      %v1078 = vpop.permute.xlu0 %1077
      %1079 = vrot.lane.b32.xlu0 %v1055, 96
      %v1080 = vpop.permute.xlu0 %1079
      %1081 = vrot.lane.b32.xlu0 %v1057, 96
      %v1082 = vpop.permute.xlu0 %1081
      %1083 = vrot.lane.b32.xlu0 %v1059, 96
      %v1084 = vpop.permute.xlu0 %1083
      %vm1085 = vcmask 785408
      %v1086 = vsel %vm1085, %v1074, %v1076
      %v1087 = vsel %vm1085, %v1076, %v1078
      %v1088 = vsel %vm1085, %v1080, %v1082
      %v1089 = vsel %vm1085, %v1082, %v1084
      %v1093 = vsel %vm773, %v1066, 0
      %v1096 = vsel %vm504, %v1088, 0
      %v1099 = vsel %vm504, %v1089, 0
      %1101 = vmatpush.bf16.msra.mxu0 0
      %1102 = vmatpush.bf16.msra.mxu0 0
      %1103 = vmatpush.bf16.msra.mxu0 0
      %1104 = vmatpush.bf16.msra.mxu0 0
      %1105 = vmatpush.bf16.msra.mxu0 0
      %1106 = vmatpush.bf16.msra.mxu0 0
      %1107 = vmatpush.bf16.msra.mxu0 %v1096
      %1108 = vmatpush.bf16.msra.mxu0 %v1086
      %1109 = vmatmul.bf16.gmra.mxu0 %v1093
      %v1110 = vpop.f32.mrf.mxu0
      %v1111 = vadd.f32 0.0, %v1110
      %v1112 = vpop.f32.mrf.mxu0
      %1113 = vdwg.mxu0
      %1114 = vmatpush.bf16.msra.mxu0 0
      %1115 = vmatpush.bf16.msra.mxu0 0
      %1116 = vmatpush.bf16.msra.mxu0 0
      %1117 = vmatpush.bf16.msra.mxu0 0
      %1118 = vmatpush.bf16.msra.mxu0 0
      %1119 = vmatpush.bf16.msra.mxu0 0
      %1120 = vmatpush.bf16.msra.mxu0 %v1099
      %1121 = vmatpush.bf16.msra.mxu0 %v1087
      %1122 = vmatmul.bf16.gmra.mxu0 %v1093
      %v1123 = vpop.f32.mrf.mxu0
      %v1124 = vadd.f32 0.0, %v1123
      %v1125 = vpop.f32.mrf.mxu0
      %1126 = vdwg.mxu0
      %v1127 = vadd.f32 %v826, %v1111
      %v1128 = vadd.f32 %v839, %v1124
      %v1129 = vld [vmem:[#allocation2] sm:$0x3f]
      %1130 = vrot.lane.b32.xlu0 %v523, 48
      %v1131 = vpop.permute.xlu0 %1130
      %v1132 = vrot.slane %v1131, 6
      %vm1133 = vcmask 392192
      %v1134 = vsel %vm1133, %v1132, %v1131
      %v1135 = vunpack.c.l.b16 %v1134
      %v1136 = vunpack.c.h.b16 %v1134
      %v1137 = vunpack.c.l.b16 0
      %v1138 = vunpack.c.h.b16 0
      %vm1139 = vcmp.ne.s32.totalorder %v1135, %v1137
      %vm1140 = vcmp.ne.s32.totalorder %v1136, %v1138
      %vm1141 = vmpackc.low %vm1140, %vm1139
      %v1142 = vsel %vm1141, %v1129, 0
      %1143 = vrot.lane.b32.xlu0 %v278, 49
      %v1144 = vpop.permute.xlu0 %1143
      %v1145 = vrot.slane %v1144, 6
      %vm1146 = vcmask 400384
      %v1147 = vsel %vm1146, %v1145, %v1144
      %v1148 = vunpack.c.l.b16 %v1147
      %v1149 = vunpack.c.h.b16 %v1147
      %v1150 = vunpack.c.l.b16 0
      %v1151 = vunpack.c.h.b16 0
      %vm1152 = vcmp.ne.s32.totalorder %v1148, %v1150
      %vm1153 = vcmp.ne.s32.totalorder %v1149, %v1151
      %vm1154 = vmpackc.low %vm1153, %vm1152
      %v1155 = vsel %vm1154, %v1129, 0
      %1156 = vrot.lane.b32.xlu0 %v301, 50
      %v1157 = vpop.permute.xlu0 %1156
      %v1158 = vrot.slane %v1157, 6
      %vm1159 = vcmask 408576
      %v1160 = vsel %vm1159, %v1158, %v1157
      %v1161 = vunpack.c.l.b16 %v1160
      %v1162 = vunpack.c.h.b16 %v1160
      %v1163 = vunpack.c.l.b16 0
      %v1164 = vunpack.c.h.b16 0
      %vm1165 = vcmp.ne.s32.totalorder %v1161, %v1163
      %vm1166 = vcmp.ne.s32.totalorder %v1162, %v1164
      %vm1167 = vmpackc.low %vm1166, %vm1165
      %v1168 = vsel %vm1167, %v1129, 0
      %1169 = vrot.lane.b32.xlu0 %v324, 52
      %v1170 = vpop.permute.xlu0 %1169
      %v1171 = vrot.slane %v1170, 6
      %vm1172 = vcmask 424960
      %v1173 = vsel %vm1172, %v1171, %v1170
      %v1174 = vunpack.c.l.b16 %v1173
      %v1175 = vunpack.c.h.b16 %v1173
      %v1176 = vunpack.c.l.b16 0
      %v1177 = vunpack.c.h.b16 0
      %vm1178 = vcmp.ne.s32.totalorder %v1174, %v1176
      %vm1179 = vcmp.ne.s32.totalorder %v1175, %v1177
      %vm1180 = vmpackc.low %vm1179, %vm1178
      %v1181 = vsel %vm1180, %v1129, 0
      %1182 = vrot.lane.b32.xlu0 %v347, 53
      %v1183 = vpop.permute.xlu0 %1182
      %v1184 = vrot.slane %v1183, 6
      %vm1185 = vcmask 433152
      %v1186 = vsel %vm1185, %v1184, %v1183
      %v1187 = vunpack.c.l.b16 %v1186
      %v1188 = vunpack.c.h.b16 %v1186
      %v1189 = vunpack.c.l.b16 0
      %v1190 = vunpack.c.h.b16 0
      %vm1191 = vcmp.ne.s32.totalorder %v1187, %v1189
      %vm1192 = vcmp.ne.s32.totalorder %v1188, %v1190
      %vm1193 = vmpackc.low %vm1192, %vm1191
      %v1194 = vsel %vm1193, %v1129, 0
      %1195 = vrot.lane.b32.xlu0 %v370, 54
      %v1196 = vpop.permute.xlu0 %1195
      %v1197 = vrot.slane %v1196, 6
      %vm1198 = vcmask 441344
      %v1199 = vsel %vm1198, %v1197, %v1196
      %v1200 = vunpack.c.l.b16 %v1199
      %v1201 = vunpack.c.h.b16 %v1199
      %v1202 = vunpack.c.l.b16 0
      %v1203 = vunpack.c.h.b16 0
      %vm1204 = vcmp.ne.s32.totalorder %v1200, %v1202
      %vm1205 = vcmp.ne.s32.totalorder %v1201, %v1203
      %vm1206 = vmpackc.low %vm1205, %vm1204
      %v1207 = vsel %vm1206, %v1129, 0
      %1209 = vst [vmem:[#allocation1] ss:$4 sm:$0xff] %v1142
      %v1210 = vld.sshfl [vmem:[#allocation1] sm:$0xff pattern:$0x73625140]
      %v1211 = vld.sshfl [vmem:[#allocation1 + $0x8] sm:$0xff pattern:$0x73625140]
      %v1212 = vld.sshfl [vmem:[#allocation1 + $0x10] sm:$0xff pattern:$0x73625140]
      %s1214 = scalar_lea.vmem [#allocation1], 1
      %1215 = vst [vmem:[%s1214] ss:$4 sm:$0xff] %v1155
      %v1216 = vld.sshfl [vmem:[#allocation1] sm:$0xff pattern:$0x73625140]
      %v1218 = vld.sshfl [vmem:[#allocation1 + $0x8] sm:$0xff pattern:$0x73625140]
      %v1220 = vld.sshfl [vmem:[#allocation1 + $0x10] sm:$0xff pattern:$0x73625140]
      %1222 = vrot.lane.b32.xlu0 %v1216, 127
      %v1223 = vpop.permute.xlu0 %1222
      %1224 = vrot.lane.b32.xlu0 %v1218, 127
      %v1225 = vpop.permute.xlu0 %1224
      %1226 = vrot.lane.b32.xlu0 %v1220, 127
      %v1227 = vpop.permute.xlu0 %1226
      %v1228 = vsel %vm403, %v1223, %v1225
      %v1229 = vsel %vm403, %v1225, %v1227
      %s1231 = scalar_lea.vmem [#allocation1], 2
      %1232 = vst [vmem:[%s1231] ss:$4 sm:$0xff] %v1168
      %v1233 = vld.sshfl [vmem:[#allocation1] sm:$0xff pattern:$0x73625140]
      %v1235 = vld.sshfl [vmem:[#allocation1 + $0x8] sm:$0xff pattern:$0x73625140]
      %v1237 = vld.sshfl [vmem:[#allocation1 + $0x10] sm:$0xff pattern:$0x73625140]
      %1239 = vrot.lane.b32.xlu0 %v1233, 126
      %v1240 = vpop.permute.xlu0 %1239
      %1241 = vrot.lane.b32.xlu0 %v1235, 126
      %v1242 = vpop.permute.xlu0 %1241
      %1243 = vrot.lane.b32.xlu0 %v1237, 126
      %v1244 = vpop.permute.xlu0 %1243
      %v1245 = vsel %vm421, %v1240, %v1242
      %v1246 = vsel %vm421, %v1242, %v1244
      %s1248 = scalar_lea.vmem [#allocation1], 3
      %1249 = vst [vmem:[%s1248] ss:$4 sm:$0xff] %v1129
      %v1250 = vld.sshfl [vmem:[#allocation1] sm:$0xff pattern:$0x73625140]
      %v1252 = vld.sshfl [vmem:[#allocation1 + $0x8] sm:$0xff pattern:$0x73625140]
      %v1254 = vld.sshfl [vmem:[#allocation1 + $0x10] sm:$0xff pattern:$0x73625140]
      %1256 = vrot.lane.b32.xlu0 %v1250, 125
      %v1257 = vpop.permute.xlu0 %1256
      %1258 = vrot.lane.b32.xlu0 %v1252, 125
      %v1259 = vpop.permute.xlu0 %1258
      %1260 = vrot.lane.b32.xlu0 %v1254, 125
      %v1261 = vpop.permute.xlu0 %1260
      %v1262 = vsel %vm439, %v1257, %v1259
      %v1263 = vsel %vm439, %v1259, %v1261
      %1265 = vst [vmem:[#allocation1] ss:$4 sm:$0xff] %v1181
      %v1266 = vld.sshfl [vmem:[#allocation1] sm:$0xff pattern:$0x73625140]
      %v1268 = vld.sshfl [vmem:[#allocation1 + $0x8] sm:$0xff pattern:$0x73625140]
      %v1270 = vld.sshfl [vmem:[#allocation1 + $0x10] sm:$0xff pattern:$0x73625140]
      %1272 = vrot.lane.b32.xlu0 %v1266, 124
      %v1273 = vpop.permute.xlu0 %1272
      %1274 = vrot.lane.b32.xlu0 %v1268, 124
      %v1275 = vpop.permute.xlu0 %1274
      %1276 = vrot.lane.b32.xlu0 %v1270, 124
      %v1277 = vpop.permute.xlu0 %1276
      %v1278 = vsel %vm456, %v1273, %v1275
      %v1279 = vsel %vm456, %v1275, %v1277
      %s1281 = scalar_lea.vmem [#allocation1], 1
      %1282 = vst [vmem:[%s1281] ss:$4 sm:$0xff] %v1194
      %v1283 = vld.sshfl [vmem:[#allocation1] sm:$0xff pattern:$0x73625140]
      %v1285 = vld.sshfl [vmem:[#allocation1 + $0x8] sm:$0xff pattern:$0x73625140]
      %v1287 = vld.sshfl [vmem:[#allocation1 + $0x10] sm:$0xff pattern:$0x73625140]
      %1289 = vrot.lane.b32.xlu0 %v1283, 123
      %v1290 = vpop.permute.xlu0 %1289
      %1291 = vrot.lane.b32.xlu0 %v1285, 123
      %v1292 = vpop.permute.xlu0 %1291
      %1293 = vrot.lane.b32.xlu0 %v1287, 123
      %v1294 = vpop.permute.xlu0 %1293
      %v1295 = vsel %vm474, %v1290, %v1292
      %v1296 = vsel %vm474, %v1292, %v1294
      %s1298 = scalar_lea.vmem [#allocation1], 2
      %1299 = vst [vmem:[%s1298] ss:$4 sm:$0xff] %v1207
      %v1300 = vld.sshfl [vmem:[#allocation1] sm:$0xff pattern:$0x73625140]
      %v1302 = vld.sshfl [vmem:[#allocation1 + $0x8] sm:$0xff pattern:$0x73625140]
      %v1304 = vld.sshfl [vmem:[#allocation1 + $0x10] sm:$0xff pattern:$0x73625140]
      %1306 = vrot.lane.b32.xlu0 %v1300, 122
      %v1307 = vpop.permute.xlu0 %1306
      %1308 = vrot.lane.b32.xlu0 %v1302, 122
      %v1309 = vpop.permute.xlu0 %1308
      %1310 = vrot.lane.b32.xlu0 %v1304, 122
      %v1311 = vpop.permute.xlu0 %1310
      %v1312 = vsel %vm492, %v1307, %v1309
      %v1313 = vsel %vm492, %v1309, %v1311
      %v1315 = vsel %vm215, %v1210, %v1228
      %v1317 = vsel %vm215, %v1211, %v1229
      %v1319 = vsel %vm215, %v1212, %v1227
      %v1321 = vsel %vm499, %v1315, %v1245
      %v1323 = vsel %vm499, %v1317, %v1246
      %v1325 = vsel %vm499, %v1319, %v1244
      %v1327 = vsel %vm504, %v1321, %v1262
      %v1329 = vsel %vm504, %v1323, %v1263
      %v1331 = vsel %vm504, %v1325, %v1261
      %v1334 = vsel %vm215, %v1278, %v1295
      %v1337 = vsel %vm215, %v1279, %v1296
      %v1340 = vsel %vm215, %v1277, %v1294
      %v1342 = vsel %vm499, %v1334, %v1312
      %v1344 = vsel %vm499, %v1337, %v1313
      %v1346 = vsel %vm499, %v1340, %v1311
      %v1347 = vld [vmem:[%s1] sm:$0x3]
      %1349 = vst [vmem:[#allocation1] ss:$4 sm:$0xff] %v1347
      %v1350 = vld.sshfl [vmem:[#allocation1] sm:$0xff pattern:$0x73625140]
      %1352 = vrot.lane.b32.xlu0 %v1350, 44
      %v1353 = vpop.permute.xlu0 %1352
      %1360 = vrot.lane.b32.xlu0 %v1327, 80
      %v1361 = vpop.permute.xlu0 %1360
      %1362 = vrot.lane.b32.xlu0 %v1329, 80
      %v1363 = vpop.permute.xlu0 %1362
      %1364 = vrot.lane.b32.xlu0 %v1331, 80
      %v1365 = vpop.permute.xlu0 %1364
      %1366 = vrot.lane.b32.xlu0 %v1342, 80
      %v1367 = vpop.permute.xlu0 %1366
      %1368 = vrot.lane.b32.xlu0 %v1344, 80
      %v1369 = vpop.permute.xlu0 %1368
      %1370 = vrot.lane.b32.xlu0 %v1346, 80
      %v1371 = vpop.permute.xlu0 %1370
      %vm1372 = vcmask 654336
      %v1373 = vsel %vm1372, %v1361, %v1363
      %v1374 = vsel %vm1372, %v1363, %v1365
      %v1375 = vsel %vm1372, %v1367, %v1369
      %v1376 = vsel %vm1372, %v1369, %v1371
      %v1380 = vsel %vm773, %v1353, 0
      %v1383 = vsel %vm504, %v1375, 0
      %v1386 = vsel %vm504, %v1376, 0
      %1388 = vmatpush.bf16.msra.mxu0 0
      %1389 = vmatpush.bf16.msra.mxu0 0
      %1390 = vmatpush.bf16.msra.mxu0 0
      %1391 = vmatpush.bf16.msra.mxu0 0
      %1392 = vmatpush.bf16.msra.mxu0 0
      %1393 = vmatpush.bf16.msra.mxu0 0
      %1394 = vmatpush.bf16.msra.mxu0 %v1383
      %1395 = vmatpush.bf16.msra.mxu0 %v1373
      %1396 = vmatmul.bf16.gmra.mxu0 %v1380
      %v1397 = vpop.f32.mrf.mxu0
      %v1398 = vadd.f32 0.0, %v1397
      %v1399 = vpop.f32.mrf.mxu0
      %1400 = vdwg.mxu0
      %1401 = vmatpush.bf16.msra.mxu0 0
      %1402 = vmatpush.bf16.msra.mxu0 0
      %1403 = vmatpush.bf16.msra.mxu0 0
      %1404 = vmatpush.bf16.msra.mxu0 0
      %1405 = vmatpush.bf16.msra.mxu0 0
      %1406 = vmatpush.bf16.msra.mxu0 0
      %1407 = vmatpush.bf16.msra.mxu0 %v1386
      %1408 = vmatpush.bf16.msra.mxu0 %v1374
      %1409 = vmatmul.bf16.gmra.mxu0 %v1380
      %v1410 = vpop.f32.mrf.mxu0
      %v1411 = vadd.f32 0.0, %v1410
      %v1412 = vpop.f32.mrf.mxu0
      %1413 = vdwg.mxu0
      %v1414 = vadd.f32 %v1127, %v1398
      %v1415 = vadd.f32 %v1128, %v1411
      %v1416 = vld [vmem:[#allocation2] sm:$0x3f]
      %1417 = vrot.lane.b32.xlu0 %v523, 64
      %v1418 = vpop.permute.xlu0 %1417
      %v1419 = vrot.slane %v1418, 6
      %vm1420 = vcmask 523264
      %v1421 = vsel %vm1420, %v1419, %v1418
      %v1422 = vunpack.c.l.b16 %v1421
      %v1423 = vunpack.c.h.b16 %v1421
      %v1424 = vunpack.c.l.b16 0
      %v1425 = vunpack.c.h.b16 0
      %vm1426 = vcmp.ne.s32.totalorder %v1422, %v1424
      %vm1427 = vcmp.ne.s32.totalorder %v1423, %v1425
      %vm1428 = vmpackc.low %vm1427, %vm1426
      %v1429 = vsel %vm1428, %v1416, 0
      %1430 = vrot.lane.b32.xlu0 %v278, 65
      %v1431 = vpop.permute.xlu0 %1430
      %v1432 = vrot.slane %v1431, 6
      %vm1433 = vcmask 531456
      %v1434 = vsel %vm1433, %v1432, %v1431
      %v1435 = vunpack.c.l.b16 %v1434
      %v1436 = vunpack.c.h.b16 %v1434
      %v1437 = vunpack.c.l.b16 0
      %v1438 = vunpack.c.h.b16 0
      %vm1439 = vcmp.ne.s32.totalorder %v1435, %v1437
      %vm1440 = vcmp.ne.s32.totalorder %v1436, %v1438
      %vm1441 = vmpackc.low %vm1440, %vm1439
      %v1442 = vsel %vm1441, %v1416, 0
      %1443 = vrot.lane.b32.xlu0 %v301, 66
      %v1444 = vpop.permute.xlu0 %1443
      %v1445 = vrot.slane %v1444, 6
      %vm1446 = vcmask 539648
      %v1447 = vsel %vm1446, %v1445, %v1444
      %v1448 = vunpack.c.l.b16 %v1447
      %v1449 = vunpack.c.h.b16 %v1447
      %v1450 = vunpack.c.l.b16 0
      %v1451 = vunpack.c.h.b16 0
      %vm1452 = vcmp.ne.s32.totalorder %v1448, %v1450
      %vm1453 = vcmp.ne.s32.totalorder %v1449, %v1451
      %vm1454 = vmpackc.low %vm1453, %vm1452
      %v1455 = vsel %vm1454, %v1416, 0
      %1456 = vrot.lane.b32.xlu0 %v324, 68
      %v1457 = vpop.permute.xlu0 %1456
      %v1458 = vrot.slane %v1457, 6
      %vm1459 = vcmask 556032
      %v1460 = vsel %vm1459, %v1458, %v1457
      %v1461 = vunpack.c.l.b16 %v1460
      %v1462 = vunpack.c.h.b16 %v1460
      %v1463 = vunpack.c.l.b16 0
      %v1464 = vunpack.c.h.b16 0
      %vm1465 = vcmp.ne.s32.totalorder %v1461, %v1463
      %vm1466 = vcmp.ne.s32.totalorder %v1462, %v1464
      %vm1467 = vmpackc.low %vm1466, %vm1465
      %v1468 = vsel %vm1467, %v1416, 0
      %1469 = vrot.lane.b32.xlu0 %v347, 69
      %v1470 = vpop.permute.xlu0 %1469
      %v1471 = vrot.slane %v1470, 6
      %vm1472 = vcmask 564224
      %v1473 = vsel %vm1472, %v1471, %v1470
      %v1474 = vunpack.c.l.b16 %v1473
      %v1475 = vunpack.c.h.b16 %v1473
      %v1476 = vunpack.c.l.b16 0
      %v1477 = vunpack.c.h.b16 0
      %vm1478 = vcmp.ne.s32.totalorder %v1474, %v1476
      %vm1479 = vcmp.ne.s32.totalorder %v1475, %v1477
      %vm1480 = vmpackc.low %vm1479, %vm1478
      %v1481 = vsel %vm1480, %v1416, 0
      %1482 = vrot.lane.b32.xlu0 %v370, 70
      %v1483 = vpop.permute.xlu0 %1482
      %v1484 = vrot.slane %v1483, 6
      %vm1485 = vcmask 572416
      %v1486 = vsel %vm1485, %v1484, %v1483
      %v1487 = vunpack.c.l.b16 %v1486
      %v1488 = vunpack.c.h.b16 %v1486
      %v1489 = vunpack.c.l.b16 0
      %v1490 = vunpack.c.h.b16 0
      %vm1491 = vcmp.ne.s32.totalorder %v1487, %v1489
      %vm1492 = vcmp.ne.s32.totalorder %v1488, %v1490
      %vm1493 = vmpackc.low %vm1492, %vm1491
      %v1494 = vsel %vm1493, %v1416, 0
      %1496 = vst [vmem:[#allocation1] ss:$4 sm:$0xff] %v1429
      %v1497 = vld.sshfl [vmem:[#allocation1] sm:$0xff pattern:$0x73625140]
      %v1498 = vld.sshfl [vmem:[#allocation1 + $0x8] sm:$0xff pattern:$0x73625140]
      %v1499 = vld.sshfl [vmem:[#allocation1 + $0x10] sm:$0xff pattern:$0x73625140]
      %s1501 = scalar_lea.vmem [#allocation1], 1
      %1502 = vst [vmem:[%s1501] ss:$4 sm:$0xff] %v1442
      %v1503 = vld.sshfl [vmem:[#allocation1] sm:$0xff pattern:$0x73625140]
      %v1505 = vld.sshfl [vmem:[#allocation1 + $0x8] sm:$0xff pattern:$0x73625140]
      %v1507 = vld.sshfl [vmem:[#allocation1 + $0x10] sm:$0xff pattern:$0x73625140]
      %1509 = vrot.lane.b32.xlu0 %v1503, 127
      %v1510 = vpop.permute.xlu0 %1509
      %1511 = vrot.lane.b32.xlu0 %v1505, 127
      %v1512 = vpop.permute.xlu0 %1511
      %1513 = vrot.lane.b32.xlu0 %v1507, 127
      %v1514 = vpop.permute.xlu0 %1513
      %v1515 = vsel %vm403, %v1510, %v1512
      %v1516 = vsel %vm403, %v1512, %v1514
      %s1518 = scalar_lea.vmem [#allocation1], 2
      %1519 = vst [vmem:[%s1518] ss:$4 sm:$0xff] %v1455
      %v1520 = vld.sshfl [vmem:[#allocation1] sm:$0xff pattern:$0x73625140]
      %v1522 = vld.sshfl [vmem:[#allocation1 + $0x8] sm:$0xff pattern:$0x73625140]
      %v1524 = vld.sshfl [vmem:[#allocation1 + $0x10] sm:$0xff pattern:$0x73625140]
      %1526 = vrot.lane.b32.xlu0 %v1520, 126
      %v1527 = vpop.permute.xlu0 %1526
      %1528 = vrot.lane.b32.xlu0 %v1522, 126
      %v1529 = vpop.permute.xlu0 %1528
      %1530 = vrot.lane.b32.xlu0 %v1524, 126
      %v1531 = vpop.permute.xlu0 %1530
      %v1532 = vsel %vm421, %v1527, %v1529
      %v1533 = vsel %vm421, %v1529, %v1531
      %s1535 = scalar_lea.vmem [#allocation1], 3
      %1536 = vst [vmem:[%s1535] ss:$4 sm:$0xff] %v1416
      %v1537 = vld.sshfl [vmem:[#allocation1] sm:$0xff pattern:$0x73625140]
      %v1539 = vld.sshfl [vmem:[#allocation1 + $0x8] sm:$0xff pattern:$0x73625140]
      %v1541 = vld.sshfl [vmem:[#allocation1 + $0x10] sm:$0xff pattern:$0x73625140]
      %1543 = vrot.lane.b32.xlu0 %v1537, 125
      %v1544 = vpop.permute.xlu0 %1543
      %1545 = vrot.lane.b32.xlu0 %v1539, 125
      %v1546 = vpop.permute.xlu0 %1545
      %1547 = vrot.lane.b32.xlu0 %v1541, 125
      %v1548 = vpop.permute.xlu0 %1547
      %v1549 = vsel %vm439, %v1544, %v1546
      %v1550 = vsel %vm439, %v1546, %v1548
      %1552 = vst [vmem:[#allocation1] ss:$4 sm:$0xff] %v1468
      %v1553 = vld.sshfl [vmem:[#allocation1] sm:$0xff pattern:$0x73625140]
      %v1555 = vld.sshfl [vmem:[#allocation1 + $0x8] sm:$0xff pattern:$0x73625140]
      %v1557 = vld.sshfl [vmem:[#allocation1 + $0x10] sm:$0xff pattern:$0x73625140]
      %1559 = vrot.lane.b32.xlu0 %v1553, 124
      %v1560 = vpop.permute.xlu0 %1559
      %1561 = vrot.lane.b32.xlu0 %v1555, 124
      %v1562 = vpop.permute.xlu0 %1561
      %1563 = vrot.lane.b32.xlu0 %v1557, 124
      %v1564 = vpop.permute.xlu0 %1563
      %v1565 = vsel %vm456, %v1560, %v1562
      %v1566 = vsel %vm456, %v1562, %v1564
      %s1568 = scalar_lea.vmem [#allocation1], 1
      %1569 = vst [vmem:[%s1568] ss:$4 sm:$0xff] %v1481
      %v1570 = vld.sshfl [vmem:[#allocation1] sm:$0xff pattern:$0x73625140]
      %v1572 = vld.sshfl [vmem:[#allocation1 + $0x8] sm:$0xff pattern:$0x73625140]
      %v1574 = vld.sshfl [vmem:[#allocation1 + $0x10] sm:$0xff pattern:$0x73625140]
      %1576 = vrot.lane.b32.xlu0 %v1570, 123
      %v1577 = vpop.permute.xlu0 %1576
      %1578 = vrot.lane.b32.xlu0 %v1572, 123
      %v1579 = vpop.permute.xlu0 %1578
      %1580 = vrot.lane.b32.xlu0 %v1574, 123
      %v1581 = vpop.permute.xlu0 %1580
      %v1582 = vsel %vm474, %v1577, %v1579
      %v1583 = vsel %vm474, %v1579, %v1581
      %s1585 = scalar_lea.vmem [#allocation1], 2
      %1586 = vst [vmem:[%s1585] ss:$4 sm:$0xff] %v1494
      %v1587 = vld.sshfl [vmem:[#allocation1] sm:$0xff pattern:$0x73625140]
      %v1589 = vld.sshfl [vmem:[#allocation1 + $0x8] sm:$0xff pattern:$0x73625140]
      %v1591 = vld.sshfl [vmem:[#allocation1 + $0x10] sm:$0xff pattern:$0x73625140]
      %1593 = vrot.lane.b32.xlu0 %v1587, 122
      %v1594 = vpop.permute.xlu0 %1593
      %1595 = vrot.lane.b32.xlu0 %v1589, 122
      %v1596 = vpop.permute.xlu0 %1595
      %1597 = vrot.lane.b32.xlu0 %v1591, 122
      %v1598 = vpop.permute.xlu0 %1597
      %v1599 = vsel %vm492, %v1594, %v1596
      %v1600 = vsel %vm492, %v1596, %v1598
      %v1602 = vsel %vm215, %v1497, %v1515
      %v1604 = vsel %vm215, %v1498, %v1516
      %v1606 = vsel %vm215, %v1499, %v1514
      %v1608 = vsel %vm499, %v1602, %v1532
      %v1610 = vsel %vm499, %v1604, %v1533
      %v1612 = vsel %vm499, %v1606, %v1531
      %v1614 = vsel %vm504, %v1608, %v1549
      %v1616 = vsel %vm504, %v1610, %v1550
      %v1618 = vsel %vm504, %v1612, %v1548
      %v1621 = vsel %vm215, %v1565, %v1582
      %v1624 = vsel %vm215, %v1566, %v1583
      %v1627 = vsel %vm215, %v1564, %v1581
      %v1629 = vsel %vm499, %v1621, %v1599
      %v1631 = vsel %vm499, %v1624, %v1600
      %v1633 = vsel %vm499, %v1627, %v1598
      %v1634 = vld [vmem:[%s1] sm:$0xf]
      %1636 = vst [vmem:[#allocation1] ss:$4 sm:$0xff] %v1634
      %v1637 = vld.sshfl [vmem:[#allocation1] sm:$0xff pattern:$0x73625140]
      %v1639 = vld.sshfl [vmem:[#allocation1 + $0x8] sm:$0xff pattern:$0x73625140]
      %1641 = vrot.lane.b32.xlu0 %v1637, 16
      %v1642 = vpop.permute.xlu0 %1641
      %1643 = vrot.lane.b32.xlu0 %v1639, 16
      %v1644 = vpop.permute.xlu0 %1643
      %v1645 = vsel %vm527, %v1642, %v1644
      %1652 = vrot.lane.b32.xlu0 %v1614, 64
      %v1653 = vpop.permute.xlu0 %1652
      %1654 = vrot.lane.b32.xlu0 %v1616, 64
      %v1655 = vpop.permute.xlu0 %1654
      %1656 = vrot.lane.b32.xlu0 %v1618, 64
      %v1657 = vpop.permute.xlu0 %1656
      %1658 = vrot.lane.b32.xlu0 %v1629, 64
      %v1659 = vpop.permute.xlu0 %1658
      %1660 = vrot.lane.b32.xlu0 %v1631, 64
      %v1661 = vpop.permute.xlu0 %1660
      %1662 = vrot.lane.b32.xlu0 %v1633, 64
      %v1663 = vpop.permute.xlu0 %1662
      %v1664 = vsel %vm1420, %v1653, %v1655
      %v1665 = vsel %vm1420, %v1655, %v1657
      %v1666 = vsel %vm1420, %v1659, %v1661
      %v1667 = vsel %vm1420, %v1661, %v1663
      %v1671 = vsel %vm773, %v1645, 0
      %v1674 = vsel %vm504, %v1666, 0
      %v1677 = vsel %vm504, %v1667, 0
      %1679 = vmatpush.bf16.msra.mxu0 0
      %1680 = vmatpush.bf16.msra.mxu0 0
      %1681 = vmatpush.bf16.msra.mxu0 0
      %1682 = vmatpush.bf16.msra.mxu0 0
      %1683 = vmatpush.bf16.msra.mxu0 0
      %1684 = vmatpush.bf16.msra.mxu0 0
      %1685 = vmatpush.bf16.msra.mxu0 %v1674
      %1686 = vmatpush.bf16.msra.mxu0 %v1664
      %1687 = vmatmul.bf16.gmra.mxu0 %v1671
      %v1688 = vpop.f32.mrf.mxu0
      %v1689 = vadd.f32 0.0, %v1688
      %v1690 = vpop.f32.mrf.mxu0
      %1691 = vdwg.mxu0
      %1692 = vmatpush.bf16.msra.mxu0 0
      %1693 = vmatpush.bf16.msra.mxu0 0
      %1694 = vmatpush.bf16.msra.mxu0 0
      %1695 = vmatpush.bf16.msra.mxu0 0
      %1696 = vmatpush.bf16.msra.mxu0 0
      %1697 = vmatpush.bf16.msra.mxu0 0
      %1698 = vmatpush.bf16.msra.mxu0 %v1677
      %1699 = vmatpush.bf16.msra.mxu0 %v1665
      %1700 = vmatmul.bf16.gmra.mxu0 %v1671
      %v1701 = vpop.f32.mrf.mxu0
      %v1702 = vadd.f32 0.0, %v1701
      %v1703 = vpop.f32.mrf.mxu0
      %1704 = vdwg.mxu0
      %v1705 = vadd.f32 %v1414, %v1689
      %v1706 = vadd.f32 %v1415, %v1702
      %v1707 = vld [vmem:[#allocation2] sm:$0x3f]
      %1708 = vrot.lane.b32.xlu0 %v523, 80
      %v1709 = vpop.permute.xlu0 %1708
      %v1710 = vrot.slane %v1709, 6
      %v1711 = vsel %vm1372, %v1710, %v1709
      %v1712 = vunpack.c.l.b16 %v1711
      %v1713 = vunpack.c.h.b16 %v1711
      %v1714 = vunpack.c.l.b16 0
      %v1715 = vunpack.c.h.b16 0
      %vm1716 = vcmp.ne.s32.totalorder %v1712, %v1714
      %vm1717 = vcmp.ne.s32.totalorder %v1713, %v1715
      %vm1718 = vmpackc.low %vm1717, %vm1716
      %v1719 = vsel %vm1718, %v1707, 0
      %1720 = vrot.lane.b32.xlu0 %v278, 81
      %v1721 = vpop.permute.xlu0 %1720
      %v1722 = vrot.slane %v1721, 6
      %vm1723 = vcmask 662528
      %v1724 = vsel %vm1723, %v1722, %v1721
      %v1725 = vunpack.c.l.b16 %v1724
      %v1726 = vunpack.c.h.b16 %v1724
      %v1727 = vunpack.c.l.b16 0
      %v1728 = vunpack.c.h.b16 0
      %vm1729 = vcmp.ne.s32.totalorder %v1725, %v1727
      %vm1730 = vcmp.ne.s32.totalorder %v1726, %v1728
      %vm1731 = vmpackc.low %vm1730, %vm1729
      %v1732 = vsel %vm1731, %v1707, 0
      %1733 = vrot.lane.b32.xlu0 %v301, 82
      %v1734 = vpop.permute.xlu0 %1733
      %v1735 = vrot.slane %v1734, 6
      %vm1736 = vcmask 670720
      %v1737 = vsel %vm1736, %v1735, %v1734
      %v1738 = vunpack.c.l.b16 %v1737
      %v1739 = vunpack.c.h.b16 %v1737
      %v1740 = vunpack.c.l.b16 0
      %v1741 = vunpack.c.h.b16 0
      %vm1742 = vcmp.ne.s32.totalorder %v1738, %v1740
      %vm1743 = vcmp.ne.s32.totalorder %v1739, %v1741
      %vm1744 = vmpackc.low %vm1743, %vm1742
      %v1745 = vsel %vm1744, %v1707, 0
      %1746 = vrot.lane.b32.xlu0 %v324, 84
      %v1747 = vpop.permute.xlu0 %1746
      %v1748 = vrot.slane %v1747, 6
      %vm1749 = vcmask 687104
      %v1750 = vsel %vm1749, %v1748, %v1747
      %v1751 = vunpack.c.l.b16 %v1750
      %v1752 = vunpack.c.h.b16 %v1750
      %v1753 = vunpack.c.l.b16 0
      %v1754 = vunpack.c.h.b16 0
      %vm1755 = vcmp.ne.s32.totalorder %v1751, %v1753
      %vm1756 = vcmp.ne.s32.totalorder %v1752, %v1754
      %vm1757 = vmpackc.low %vm1756, %vm1755
      %v1758 = vsel %vm1757, %v1707, 0
      %1759 = vrot.lane.b32.xlu0 %v347, 85
      %v1760 = vpop.permute.xlu0 %1759
      %v1761 = vrot.slane %v1760, 6
      %vm1762 = vcmask 695296
      %v1763 = vsel %vm1762, %v1761, %v1760
      %v1764 = vunpack.c.l.b16 %v1763
      %v1765 = vunpack.c.h.b16 %v1763
      %v1766 = vunpack.c.l.b16 0
      %v1767 = vunpack.c.h.b16 0
      %vm1768 = vcmp.ne.s32.totalorder %v1764, %v1766
      %vm1769 = vcmp.ne.s32.totalorder %v1765, %v1767
      %vm1770 = vmpackc.low %vm1769, %vm1768
      %v1771 = vsel %vm1770, %v1707, 0
      %1772 = vrot.lane.b32.xlu0 %v370, 86
      %v1773 = vpop.permute.xlu0 %1772
      %v1774 = vrot.slane %v1773, 6
      %vm1775 = vcmask 703488
      %v1776 = vsel %vm1775, %v1774, %v1773
      %v1777 = vunpack.c.l.b16 %v1776
      %v1778 = vunpack.c.h.b16 %v1776
      %v1779 = vunpack.c.l.b16 0
      %v1780 = vunpack.c.h.b16 0
      %vm1781 = vcmp.ne.s32.totalorder %v1777, %v1779
      %vm1782 = vcmp.ne.s32.totalorder %v1778, %v1780
      %vm1783 = vmpackc.low %vm1782, %vm1781
      %v1784 = vsel %vm1783, %v1707, 0
      %1786 = vst [vmem:[#allocation1] ss:$4 sm:$0xff] %v1719
      %v1787 = vld.sshfl [vmem:[#allocation1] sm:$0xff pattern:$0x73625140]
      %v1788 = vld.sshfl [vmem:[#allocation1 + $0x8] sm:$0xff pattern:$0x73625140]
      %v1789 = vld.sshfl [vmem:[#allocation1 + $0x10] sm:$0xff pattern:$0x73625140]
      %s1791 = scalar_lea.vmem [#allocation1], 1
      %1792 = vst [vmem:[%s1791] ss:$4 sm:$0xff] %v1732
      %v1793 = vld.sshfl [vmem:[#allocation1] sm:$0xff pattern:$0x73625140]
      %v1795 = vld.sshfl [vmem:[#allocation1 + $0x8] sm:$0xff pattern:$0x73625140]
      %v1797 = vld.sshfl [vmem:[#allocation1 + $0x10] sm:$0xff pattern:$0x73625140]
      %1799 = vrot.lane.b32.xlu0 %v1793, 127
      %v1800 = vpop.permute.xlu0 %1799
      %1801 = vrot.lane.b32.xlu0 %v1795, 127
      %v1802 = vpop.permute.xlu0 %1801
      %1803 = vrot.lane.b32.xlu0 %v1797, 127
      %v1804 = vpop.permute.xlu0 %1803
      %v1805 = vsel %vm403, %v1800, %v1802
      %v1806 = vsel %vm403, %v1802, %v1804
      %s1808 = scalar_lea.vmem [#allocation1], 2
      %1809 = vst [vmem:[%s1808] ss:$4 sm:$0xff] %v1745
      %v1810 = vld.sshfl [vmem:[#allocation1] sm:$0xff pattern:$0x73625140]
      %v1812 = vld.sshfl [vmem:[#allocation1 + $0x8] sm:$0xff pattern:$0x73625140]
      %v1814 = vld.sshfl [vmem:[#allocation1 + $0x10] sm:$0xff pattern:$0x73625140]
      %1816 = vrot.lane.b32.xlu0 %v1810, 126
      %v1817 = vpop.permute.xlu0 %1816
      %1818 = vrot.lane.b32.xlu0 %v1812, 126
      %v1819 = vpop.permute.xlu0 %1818
      %1820 = vrot.lane.b32.xlu0 %v1814, 126
      %v1821 = vpop.permute.xlu0 %1820
      %v1822 = vsel %vm421, %v1817, %v1819
      %v1823 = vsel %vm421, %v1819, %v1821
      %s1825 = scalar_lea.vmem [#allocation1], 3
      %1826 = vst [vmem:[%s1825] ss:$4 sm:$0xff] %v1707
      %v1827 = vld.sshfl [vmem:[#allocation1] sm:$0xff pattern:$0x73625140]
      %v1829 = vld.sshfl [vmem:[#allocation1 + $0x8] sm:$0xff pattern:$0x73625140]
      %v1831 = vld.sshfl [vmem:[#allocation1 + $0x10] sm:$0xff pattern:$0x73625140]
      %1833 = vrot.lane.b32.xlu0 %v1827, 125
      %v1834 = vpop.permute.xlu0 %1833
      %1835 = vrot.lane.b32.xlu0 %v1829, 125
      %v1836 = vpop.permute.xlu0 %1835
      %1837 = vrot.lane.b32.xlu0 %v1831, 125
      %v1838 = vpop.permute.xlu0 %1837
      %v1839 = vsel %vm439, %v1834, %v1836
      %v1840 = vsel %vm439, %v1836, %v1838
      %1842 = vst [vmem:[#allocation1] ss:$4 sm:$0xff] %v1758
      %v1843 = vld.sshfl [vmem:[#allocation1] sm:$0xff pattern:$0x73625140]
      %v1845 = vld.sshfl [vmem:[#allocation1 + $0x8] sm:$0xff pattern:$0x73625140]
      %v1847 = vld.sshfl [vmem:[#allocation1 + $0x10] sm:$0xff pattern:$0x73625140]
      %1849 = vrot.lane.b32.xlu0 %v1843, 124
      %v1850 = vpop.permute.xlu0 %1849
      %1851 = vrot.lane.b32.xlu0 %v1845, 124
      %v1852 = vpop.permute.xlu0 %1851
      %1853 = vrot.lane.b32.xlu0 %v1847, 124
      %v1854 = vpop.permute.xlu0 %1853
      %v1855 = vsel %vm456, %v1850, %v1852
      %v1856 = vsel %vm456, %v1852, %v1854
      %s1858 = scalar_lea.vmem [#allocation1], 1
      %1859 = vst [vmem:[%s1858] ss:$4 sm:$0xff] %v1771
      %v1860 = vld.sshfl [vmem:[#allocation1] sm:$0xff pattern:$0x73625140]
      %v1862 = vld.sshfl [vmem:[#allocation1 + $0x8] sm:$0xff pattern:$0x73625140]
      %v1864 = vld.sshfl [vmem:[#allocation1 + $0x10] sm:$0xff pattern:$0x73625140]
      %1866 = vrot.lane.b32.xlu0 %v1860, 123
      %v1867 = vpop.permute.xlu0 %1866
      %1868 = vrot.lane.b32.xlu0 %v1862, 123
      %v1869 = vpop.permute.xlu0 %1868
      %1870 = vrot.lane.b32.xlu0 %v1864, 123
      %v1871 = vpop.permute.xlu0 %1870
      %v1872 = vsel %vm474, %v1867, %v1869
      %v1873 = vsel %vm474, %v1869, %v1871
      %s1875 = scalar_lea.vmem [#allocation1], 2
      %1876 = vst [vmem:[%s1875] ss:$4 sm:$0xff] %v1784
      %v1877 = vld.sshfl [vmem:[#allocation1] sm:$0xff pattern:$0x73625140]
      %v1879 = vld.sshfl [vmem:[#allocation1 + $0x8] sm:$0xff pattern:$0x73625140]
      %v1881 = vld.sshfl [vmem:[#allocation1 + $0x10] sm:$0xff pattern:$0x73625140]
      %1883 = vrot.lane.b32.xlu0 %v1877, 122
      %v1884 = vpop.permute.xlu0 %1883
      %1885 = vrot.lane.b32.xlu0 %v1879, 122
      %v1886 = vpop.permute.xlu0 %1885
      %1887 = vrot.lane.b32.xlu0 %v1881, 122
      %v1888 = vpop.permute.xlu0 %1887
      %v1889 = vsel %vm492, %v1884, %v1886
      %v1890 = vsel %vm492, %v1886, %v1888
      %v1892 = vsel %vm215, %v1787, %v1805
      %v1894 = vsel %vm215, %v1788, %v1806
      %v1896 = vsel %vm215, %v1789, %v1804
      %v1898 = vsel %vm499, %v1892, %v1822
      %v1900 = vsel %vm499, %v1894, %v1823
      %v1902 = vsel %vm499, %v1896, %v1821
      %v1904 = vsel %vm504, %v1898, %v1839
      %v1906 = vsel %vm504, %v1900, %v1840
      %v1908 = vsel %vm504, %v1902, %v1838
      %v1911 = vsel %vm215, %v1855, %v1872
      %v1914 = vsel %vm215, %v1856, %v1873
      %v1917 = vsel %vm215, %v1854, %v1871
      %v1919 = vsel %vm499, %v1911, %v1889
      %v1921 = vsel %vm499, %v1914, %v1890
      %v1923 = vsel %vm499, %v1917, %v1888
      %v1924 = vld [vmem:[%s1 + $0x2] sm:$0x3]
      %1926 = vst [vmem:[#allocation1] ss:$4 sm:$0xff] %v1924
      %v1927 = vld.sshfl [vmem:[#allocation1] sm:$0xff pattern:$0x73625140]
      %1929 = vrot.lane.b32.xlu0 %v1927, 116
      %v1930 = vpop.permute.xlu0 %1929
      %1937 = vrot.lane.b32.xlu0 %v1904, 48
      %v1938 = vpop.permute.xlu0 %1937
      %1939 = vrot.lane.b32.xlu0 %v1906, 48
      %v1940 = vpop.permute.xlu0 %1939
      %1941 = vrot.lane.b32.xlu0 %v1908, 48
      %v1942 = vpop.permute.xlu0 %1941
      %1943 = vrot.lane.b32.xlu0 %v1919, 48
      %v1944 = vpop.permute.xlu0 %1943
      %1945 = vrot.lane.b32.xlu0 %v1921, 48
      %v1946 = vpop.permute.xlu0 %1945
      %1947 = vrot.lane.b32.xlu0 %v1923, 48
      %v1948 = vpop.permute.xlu0 %1947
      %v1949 = vsel %vm1133, %v1938, %v1940
      %v1950 = vsel %vm1133, %v1940, %v1942
      %v1951 = vsel %vm1133, %v1944, %v1946
      %v1952 = vsel %vm1133, %v1946, %v1948
      %v1956 = vsel %vm773, %v1930, 0
      %v1959 = vsel %vm504, %v1951, 0
      %v1962 = vsel %vm504, %v1952, 0
      %1964 = vmatpush.bf16.msra.mxu0 0
      %1965 = vmatpush.bf16.msra.mxu0 0
      %1966 = vmatpush.bf16.msra.mxu0 0
      %1967 = vmatpush.bf16.msra.mxu0 0
      %1968 = vmatpush.bf16.msra.mxu0 0
      %1969 = vmatpush.bf16.msra.mxu0 0
      %1970 = vmatpush.bf16.msra.mxu0 %v1959
      %1971 = vmatpush.bf16.msra.mxu0 %v1949
      %1972 = vmatmul.bf16.gmra.mxu0 %v1956
      %v1973 = vpop.f32.mrf.mxu0
      %v1974 = vadd.f32 0.0, %v1973
      %v1975 = vpop.f32.mrf.mxu0
      %1976 = vdwg.mxu0
      %1977 = vmatpush.bf16.msra.mxu0 0
      %1978 = vmatpush.bf16.msra.mxu0 0
      %1979 = vmatpush.bf16.msra.mxu0 0
      %1980 = vmatpush.bf16.msra.mxu0 0
      %1981 = vmatpush.bf16.msra.mxu0 0
      %1982 = vmatpush.bf16.msra.mxu0 0
      %1983 = vmatpush.bf16.msra.mxu0 %v1962
      %1984 = vmatpush.bf16.msra.mxu0 %v1950
      %1985 = vmatmul.bf16.gmra.mxu0 %v1956
      %v1986 = vpop.f32.mrf.mxu0
      %v1987 = vadd.f32 0.0, %v1986
      %v1988 = vpop.f32.mrf.mxu0
      %1989 = vdwg.mxu0
      %v1990 = vadd.f32 %v1705, %v1974
      %v1991 = vadd.f32 %v1706, %v1987
      %v1992 = vld [vmem:[#allocation2] sm:$0x3f]
      %1993 = vrot.lane.b32.xlu0 %v523, 96
      %v1994 = vpop.permute.xlu0 %1993
      %v1995 = vrot.slane %v1994, 6
      %v1996 = vsel %vm1085, %v1995, %v1994
      %v1997 = vunpack.c.l.b16 %v1996
      %v1998 = vunpack.c.h.b16 %v1996
      %v1999 = vunpack.c.l.b16 0
      %v2000 = vunpack.c.h.b16 0
      %vm2001 = vcmp.ne.s32.totalorder %v1997, %v1999
      %vm2002 = vcmp.ne.s32.totalorder %v1998, %v2000
      %vm2003 = vmpackc.low %vm2002, %vm2001
      %v2004 = vsel %vm2003, %v1992, 0
      %2005 = vrot.lane.b32.xlu0 %v278, 97
      %v2006 = vpop.permute.xlu0 %2005
      %v2007 = vrot.slane %v2006, 6
      %vm2008 = vcmask 793600
      %v2009 = vsel %vm2008, %v2007, %v2006
      %v2010 = vunpack.c.l.b16 %v2009
      %v2011 = vunpack.c.h.b16 %v2009
      %v2012 = vunpack.c.l.b16 0
      %v2013 = vunpack.c.h.b16 0
      %vm2014 = vcmp.ne.s32.totalorder %v2010, %v2012
      %vm2015 = vcmp.ne.s32.totalorder %v2011, %v2013
      %vm2016 = vmpackc.low %vm2015, %vm2014
      %v2017 = vsel %vm2016, %v1992, 0
      %2018 = vrot.lane.b32.xlu0 %v301, 98
      %v2019 = vpop.permute.xlu0 %2018
      %v2020 = vrot.slane %v2019, 6
      %vm2021 = vcmask 801792
      %v2022 = vsel %vm2021, %v2020, %v2019
      %v2023 = vunpack.c.l.b16 %v2022
      %v2024 = vunpack.c.h.b16 %v2022
      %v2025 = vunpack.c.l.b16 0
      %v2026 = vunpack.c.h.b16 0
      %vm2027 = vcmp.ne.s32.totalorder %v2023, %v2025
      %vm2028 = vcmp.ne.s32.totalorder %v2024, %v2026
      %vm2029 = vmpackc.low %vm2028, %vm2027
      %v2030 = vsel %vm2029, %v1992, 0
      %2031 = vrot.lane.b32.xlu0 %v324, 100
      %v2032 = vpop.permute.xlu0 %2031
      %v2033 = vrot.slane %v2032, 6
      %vm2034 = vcmask 818176
      %v2035 = vsel %vm2034, %v2033, %v2032
      %v2036 = vunpack.c.l.b16 %v2035
      %v2037 = vunpack.c.h.b16 %v2035
      %v2038 = vunpack.c.l.b16 0
      %v2039 = vunpack.c.h.b16 0
      %vm2040 = vcmp.ne.s32.totalorder %v2036, %v2038
      %vm2041 = vcmp.ne.s32.totalorder %v2037, %v2039
      %vm2042 = vmpackc.low %vm2041, %vm2040
      %v2043 = vsel %vm2042, %v1992, 0
      %2044 = vrot.lane.b32.xlu0 %v347, 101
      %v2045 = vpop.permute.xlu0 %2044
      %v2046 = vrot.slane %v2045, 6
      %vm2047 = vcmask 826368
      %v2048 = vsel %vm2047, %v2046, %v2045
      %v2049 = vunpack.c.l.b16 %v2048
      %v2050 = vunpack.c.h.b16 %v2048
      %v2051 = vunpack.c.l.b16 0
      %v2052 = vunpack.c.h.b16 0
      %vm2053 = vcmp.ne.s32.totalorder %v2049, %v2051
      %vm2054 = vcmp.ne.s32.totalorder %v2050, %v2052
      %vm2055 = vmpackc.low %vm2054, %vm2053
      %v2056 = vsel %vm2055, %v1992, 0
      %2057 = vrot.lane.b32.xlu0 %v370, 102
      %v2058 = vpop.permute.xlu0 %2057
      %v2059 = vrot.slane %v2058, 6
      %vm2060 = vcmask 834560
      %v2061 = vsel %vm2060, %v2059, %v2058
      %v2062 = vunpack.c.l.b16 %v2061
      %v2063 = vunpack.c.h.b16 %v2061
      %v2064 = vunpack.c.l.b16 0
      %v2065 = vunpack.c.h.b16 0
      %vm2066 = vcmp.ne.s32.totalorder %v2062, %v2064
      %vm2067 = vcmp.ne.s32.totalorder %v2063, %v2065
      %vm2068 = vmpackc.low %vm2067, %vm2066
      %v2069 = vsel %vm2068, %v1992, 0
      %2071 = vst [vmem:[#allocation1] ss:$4 sm:$0xff] %v2004
      %v2072 = vld.sshfl [vmem:[#allocation1] sm:$0xff pattern:$0x73625140]
      %v2073 = vld.sshfl [vmem:[#allocation1 + $0x8] sm:$0xff pattern:$0x73625140]
      %v2074 = vld.sshfl [vmem:[#allocation1 + $0x10] sm:$0xff pattern:$0x73625140]
      %s2076 = scalar_lea.vmem [#allocation1], 1
      %2077 = vst [vmem:[%s2076] ss:$4 sm:$0xff] %v2017
      %v2078 = vld.sshfl [vmem:[#allocation1] sm:$0xff pattern:$0x73625140]
      %v2080 = vld.sshfl [vmem:[#allocation1 + $0x8] sm:$0xff pattern:$0x73625140]
      %v2082 = vld.sshfl [vmem:[#allocation1 + $0x10] sm:$0xff pattern:$0x73625140]
      %2084 = vrot.lane.b32.xlu0 %v2078, 127
      %v2085 = vpop.permute.xlu0 %2084
      %2086 = vrot.lane.b32.xlu0 %v2080, 127
      %v2087 = vpop.permute.xlu0 %2086
      %2088 = vrot.lane.b32.xlu0 %v2082, 127
      %v2089 = vpop.permute.xlu0 %2088
      %v2090 = vsel %vm403, %v2085, %v2087
      %v2091 = vsel %vm403, %v2087, %v2089
      %s2093 = scalar_lea.vmem [#allocation1], 2
      %2094 = vst [vmem:[%s2093] ss:$4 sm:$0xff] %v2030
      %v2095 = vld.sshfl [vmem:[#allocation1] sm:$0xff pattern:$0x73625140]
      %v2097 = vld.sshfl [vmem:[#allocation1 + $0x8] sm:$0xff pattern:$0x73625140]
      %v2099 = vld.sshfl [vmem:[#allocation1 + $0x10] sm:$0xff pattern:$0x73625140]
      %2101 = vrot.lane.b32.xlu0 %v2095, 126
      %v2102 = vpop.permute.xlu0 %2101
      %2103 = vrot.lane.b32.xlu0 %v2097, 126
      %v2104 = vpop.permute.xlu0 %2103
      %2105 = vrot.lane.b32.xlu0 %v2099, 126
      %v2106 = vpop.permute.xlu0 %2105
      %v2107 = vsel %vm421, %v2102, %v2104
      %v2108 = vsel %vm421, %v2104, %v2106
      %s2110 = scalar_lea.vmem [#allocation1], 3
      %2111 = vst [vmem:[%s2110] ss:$4 sm:$0xff] %v1992
      %v2112 = vld.sshfl [vmem:[#allocation1] sm:$0xff pattern:$0x73625140]
      %v2114 = vld.sshfl [vmem:[#allocation1 + $0x8] sm:$0xff pattern:$0x73625140]
      %v2116 = vld.sshfl [vmem:[#allocation1 + $0x10] sm:$0xff pattern:$0x73625140]
      %2118 = vrot.lane.b32.xlu0 %v2112, 125
      %v2119 = vpop.permute.xlu0 %2118
      %2120 = vrot.lane.b32.xlu0 %v2114, 125
      %v2121 = vpop.permute.xlu0 %2120
      %2122 = vrot.lane.b32.xlu0 %v2116, 125
      %v2123 = vpop.permute.xlu0 %2122
      %v2124 = vsel %vm439, %v2119, %v2121
      %v2125 = vsel %vm439, %v2121, %v2123
      %2127 = vst [vmem:[#allocation1] ss:$4 sm:$0xff] %v2043
      %v2128 = vld.sshfl [vmem:[#allocation1] sm:$0xff pattern:$0x73625140]
      %v2130 = vld.sshfl [vmem:[#allocation1 + $0x8] sm:$0xff pattern:$0x73625140]
      %v2132 = vld.sshfl [vmem:[#allocation1 + $0x10] sm:$0xff pattern:$0x73625140]
      %2134 = vrot.lane.b32.xlu0 %v2128, 124
      %v2135 = vpop.permute.xlu0 %2134
      %2136 = vrot.lane.b32.xlu0 %v2130, 124
      %v2137 = vpop.permute.xlu0 %2136
      %2138 = vrot.lane.b32.xlu0 %v2132, 124
      %v2139 = vpop.permute.xlu0 %2138
      %v2140 = vsel %vm456, %v2135, %v2137
      %v2141 = vsel %vm456, %v2137, %v2139
      %s2143 = scalar_lea.vmem [#allocation1], 1
      %2144 = vst [vmem:[%s2143] ss:$4 sm:$0xff] %v2056
      %v2145 = vld.sshfl [vmem:[#allocation1] sm:$0xff pattern:$0x73625140]
      %v2147 = vld.sshfl [vmem:[#allocation1 + $0x8] sm:$0xff pattern:$0x73625140]
      %v2149 = vld.sshfl [vmem:[#allocation1 + $0x10] sm:$0xff pattern:$0x73625140]
      %2151 = vrot.lane.b32.xlu0 %v2145, 123
      %v2152 = vpop.permute.xlu0 %2151
      %2153 = vrot.lane.b32.xlu0 %v2147, 123
      %v2154 = vpop.permute.xlu0 %2153
      %2155 = vrot.lane.b32.xlu0 %v2149, 123
      %v2156 = vpop.permute.xlu0 %2155
      %v2157 = vsel %vm474, %v2152, %v2154
      %v2158 = vsel %vm474, %v2154, %v2156
      %s2160 = scalar_lea.vmem [#allocation1], 2
      %2161 = vst [vmem:[%s2160] ss:$4 sm:$0xff] %v2069
      %v2162 = vld.sshfl [vmem:[#allocation1] sm:$0xff pattern:$0x73625140]
      %v2164 = vld.sshfl [vmem:[#allocation1 + $0x8] sm:$0xff pattern:$0x73625140]
      %v2166 = vld.sshfl [vmem:[#allocation1 + $0x10] sm:$0xff pattern:$0x73625140]
      %2168 = vrot.lane.b32.xlu0 %v2162, 122
      %v2169 = vpop.permute.xlu0 %2168
      %2170 = vrot.lane.b32.xlu0 %v2164, 122
      %v2171 = vpop.permute.xlu0 %2170
      %2172 = vrot.lane.b32.xlu0 %v2166, 122
      %v2173 = vpop.permute.xlu0 %2172
      %v2174 = vsel %vm492, %v2169, %v2171
      %v2175 = vsel %vm492, %v2171, %v2173
      %v2177 = vsel %vm215, %v2072, %v2090
      %v2179 = vsel %vm215, %v2073, %v2091
      %v2181 = vsel %vm215, %v2074, %v2089
      %v2183 = vsel %vm499, %v2177, %v2107
      %v2185 = vsel %vm499, %v2179, %v2108
      %v2187 = vsel %vm499, %v2181, %v2106
      %v2189 = vsel %vm504, %v2183, %v2124
      %v2191 = vsel %vm504, %v2185, %v2125
      %v2193 = vsel %vm504, %v2187, %v2123
      %v2196 = vsel %vm215, %v2140, %v2157
      %v2199 = vsel %vm215, %v2141, %v2158
      %v2202 = vsel %vm215, %v2139, %v2156
      %v2204 = vsel %vm499, %v2196, %v2174
      %v2206 = vsel %vm499, %v2199, %v2175
      %v2208 = vsel %vm499, %v2202, %v2173
      %v2209 = vld [vmem:[%s1 + $0x2] sm:$0x3]
      %2211 = vst [vmem:[#allocation1] ss:$4 sm:$0xff] %v2209
      %v2212 = vld.sshfl [vmem:[#allocation1] sm:$0xff pattern:$0x73625140]
      %2214 = vrot.lane.b32.xlu0 %v2212, 88
      %v2215 = vpop.permute.xlu0 %2214
      %2222 = vrot.lane.b32.xlu0 %v2189, 32
      %v2223 = vpop.permute.xlu0 %2222
      %2224 = vrot.lane.b32.xlu0 %v2191, 32
      %v2225 = vpop.permute.xlu0 %2224
      %2226 = vrot.lane.b32.xlu0 %v2193, 32
      %v2227 = vpop.permute.xlu0 %2226
      %2228 = vrot.lane.b32.xlu0 %v2204, 32
      %v2229 = vpop.permute.xlu0 %2228
      %2230 = vrot.lane.b32.xlu0 %v2206, 32
      %v2231 = vpop.permute.xlu0 %2230
      %2232 = vrot.lane.b32.xlu0 %v2208, 32
      %v2233 = vpop.permute.xlu0 %2232
      %v2234 = vsel %vm846, %v2223, %v2225
      %v2235 = vsel %vm846, %v2225, %v2227
      %v2236 = vsel %vm846, %v2229, %v2231
      %v2237 = vsel %vm846, %v2231, %v2233
      %v2241 = vsel %vm773, %v2215, 0
      %v2244 = vsel %vm504, %v2236, 0
      %v2247 = vsel %vm504, %v2237, 0
      %2249 = vmatpush.bf16.msra.mxu0 0
      %2250 = vmatpush.bf16.msra.mxu0 0
      %2251 = vmatpush.bf16.msra.mxu0 0
      %2252 = vmatpush.bf16.msra.mxu0 0
      %2253 = vmatpush.bf16.msra.mxu0 0
      %2254 = vmatpush.bf16.msra.mxu0 0
      %2255 = vmatpush.bf16.msra.mxu0 %v2244
      %2256 = vmatpush.bf16.msra.mxu0 %v2234
      %2257 = vmatmul.bf16.gmra.mxu0 %v2241
      %v2258 = vpop.f32.mrf.mxu0
      %v2259 = vadd.f32 0.0, %v2258
      %v2260 = vpop.f32.mrf.mxu0
      %2261 = vdwg.mxu0
      %2262 = vmatpush.bf16.msra.mxu0 0
      %2263 = vmatpush.bf16.msra.mxu0 0
      %2264 = vmatpush.bf16.msra.mxu0 0
      %2265 = vmatpush.bf16.msra.mxu0 0
      %2266 = vmatpush.bf16.msra.mxu0 0
      %2267 = vmatpush.bf16.msra.mxu0 0
      %2268 = vmatpush.bf16.msra.mxu0 %v2247
      %2269 = vmatpush.bf16.msra.mxu0 %v2235
      %2270 = vmatmul.bf16.gmra.mxu0 %v2241
      %v2271 = vpop.f32.mrf.mxu0
      %v2272 = vadd.f32 0.0, %v2271
      %v2273 = vpop.f32.mrf.mxu0
      %2274 = vdwg.mxu0
      %v2275 = vadd.f32 %v1990, %v2259
      %v2276 = vadd.f32 %v1991, %v2272
      %v2277 = vld [vmem:[%s2] sm:$0xf]
      %2279 = vset.pattern.permute.xlu0 0
      %2280 = vperm.xlu0 %2279, %v2277
      %v2281 = vpop.permute.xlu0 %2280
      %v2283 = vadd.f32 %v2275, %v2281
      %v2284 = vadd.f32 %v2276, %v2281
      %v2285 = vmax.f32 %v2283, 0.0
      %v2286 = vmax.f32 %v2284, 0.0
      %v2289 = vrot.slane %v2286, 4
      %v2290 = vsel %vm499, %v2285, %v2289
      %2292 = vst [vmem:[%s197] sm:$0xff] %v2290
      %p2293 = scmp.lt.s32.totalorder %s15, 1
      %s2294 = scalar_select %p2293, %s15, 1
      %s2295 = smul.addr %s2294, 2
      %s2296 = smul.addr %s2295, 4
      %s2297 = scalar_lea.vmem %s4, %s2296
      // Predicated region
      $region37: #{multiscale_block.1} parent=35 // pred_check
        %p2298 = pneg %p122
      $region38: #{multiscale_block.1} parent=35 // pred_check_branch
        %2300 = sbr.rel (%p2298) target = $region40
      $region39: #{multiscale_block.1} parent=35 // pred_region
        _
      $region40: #{multiscale_block.1} parent=35 // pred_fallthru
        _
    $region36: #{multiscale_block.1} parent=5 // pred_fallthru
      _
    %p2301 = scmp.le.s32.totalorder 2, %s10
    // Predicated region
    $region41: #{multiscale_block.1} parent=5 // pred_check
      %p2302 = pneg %p2301
    $region42: #{multiscale_block.1} parent=5 // pred_check_branch
      %2304 = sbr.rel (%p2302) target = $region44
    $region43: #{multiscale_block.1} parent=5 // pred_region
      %s2305 = ssub.s32 %s10, 2
      // Predicated region
      $region45: #{multiscale_block.1} parent=43 // pred_check
        %p2306 = pneg %p128
      $region46: #{multiscale_block.1} parent=43 // pred_check_branch
        %2308 = sbr.rel (%p2306) target = $region48
      $region47: #{multiscale_block.1} parent=43 // pred_region
        %p2309 = scmp.lt.s32.totalorder %s16, 1
        %s2310 = scalar_select %p2309, %s16, 1
        %s2311 = smul.addr %s2310, 2
        %s2312 = smul.addr %s2311, 4
        %s2313 = scalar_lea.vmem %s4, %s2312
      $region48: #{multiscale_block.1} parent=43 // pred_fallthru
        _
    $region44: #{multiscale_block.1} parent=5 // pred_fallthru
      _
  $region6: #{multiscale_block.1} parent=0 // loop_footer
    %s14 = sadd.s32 1, %s10
  $region7: #{multiscale_block.1} parent=0 // loop_footer_branch
    %9 = sbr.rel target = $region3
  $region8: #{multiscale_block.1} parent=0 // loop_exit
    _

</llo_original>
